<compile_context>
chip_gen: v6e
topology: v6e:2x2x1
jax: 0.10.0
libtpu: 0.0.40
codegen_flags: <defaults>
</compile_context>

<pallas_src>
import jax
import jax.numpy as jnp
from jax.experimental import pallas as pl
from jax.experimental.pallas import tpu as pltpu

_LANE = 128


def _encoder_kernel(x_ref, wih_ref, whh_ref, b_ref, wlin_ref, blin_ref,
                    dec_ref, h_ref, c_ref):
    """LSTM recurrence (+ final-step linear), all in VMEM.

    x_ref:    (TB, T, F)     batch_first input block
    wih_ref:  (F, 4*Hp)      input->gates weights, per-gate lane-padded
    whh_ref:  (Hp, 4*Hp)     hidden->gates weights, per-gate lane-padded
    b_ref:    (1, 4*Hp)      combined bias (b_ih + b_hh), lane-padded
    wlin_ref: (F, 128)       linear weight in lane 0, rest zero
    blin_ref: (1, 128)       linear bias in lane 0, rest zero
    dec_ref:  (TB, 128)      linear(last_observation), lane 0 valid
    h_ref:    (TB, Hp)       final hidden state (first H lanes valid)
    c_ref:    (TB, Hp)       final cell state   (first H lanes valid)
    """
    TB, T, F = x_ref.shape
    Hp = whh_ref.shape[0]
    G4 = 4 * Hp

    x = x_ref[...]                                   # (TB, T, F)
    wih = wih_ref[...]
    whh = whh_ref[...]
    b = b_ref[...]

    # Hoisted input projection: one large MXU matmul over all timesteps.
    gx = jnp.dot(x.reshape(TB * T, F), wih,
                 preferred_element_type=jnp.float32) + b    # (TB*T, 4*Hp)
    gx = gx.reshape(TB, T, G4)                               # (TB, T, 4*Hp)

    h = jnp.zeros((TB, Hp), jnp.float32)
    c = jnp.zeros((TB, Hp), jnp.float32)

    # Fully unrolled static time loop: only the (TB,Hp)@(Hp,4Hp) matmul and the
    # gate nonlinearities sit on the serial chain.  Gate slices are 128-lane
    # aligned (Hp multiple of 128).
    for t in range(T):
        gates = gx[:, t, :] + jnp.dot(h, whh,
                                      preferred_element_type=jnp.float32)
        i_g = jax.nn.sigmoid(gates[:, 0 * Hp:1 * Hp])
        f_g = jax.nn.sigmoid(gates[:, 1 * Hp:2 * Hp])
        g_g = jnp.tanh(gates[:, 2 * Hp:3 * Hp])
        o_g = jax.nn.sigmoid(gates[:, 3 * Hp:4 * Hp])
        c = f_g * c + i_g * g_g
        h = o_g * jnp.tanh(c)

    h_ref[...] = h
    c_ref[...] = c

    # decoder_input = Linear(batches[:, -1, :]); lane-dense padded output.
    dec_ref[...] = (jnp.dot(x[:, T - 1, :], wlin_ref[...],
                            preferred_element_type=jnp.float32)
                    + blin_ref[...])


def encoder_forward(batches, params):
    """batches: (B, T, F) float32 (PyTorch batch_first layout).

    Returns (decoder_input, (h_out, c_out)) with shapes
    (B, 1, 1), (n_layers=1, B, H), (1, B, H) — matching the PyTorch module.
    """
    B, T, F = batches.shape
    H = params["w_hh"].shape[1]                     # w_hh: (4H, H)
    Hp = ((H + _LANE - 1) // _LANE) * _LANE         # lane-aligned per-gate width
    G4 = 4 * Hp
    f32 = jnp.float32

    w_ih = params["w_ih"].astype(f32)               # (4H, F), gate order i,f,g,o
    w_hh = params["w_hh"].astype(f32)               # (4H, H)
    bias = (params["b_ih"] + params["b_hh"]).astype(f32)   # (4H,)

    # Per-gate lane-padded, right-multiply weight layout.
    wih_p = jnp.zeros((F, G4), f32)
    whh_p = jnp.zeros((Hp, G4), f32)
    b_p = jnp.zeros((1, G4), f32)
    for k in range(4):
        wih_p = wih_p.at[:, k * Hp:k * Hp + H].set(w_ih[k * H:(k + 1) * H, :].T)
        whh_p = whh_p.at[:H, k * Hp:k * Hp + H].set(w_hh[k * H:(k + 1) * H, :].T)
        b_p = b_p.at[:, k * Hp:k * Hp + H].set(bias[k * H:(k + 1) * H][None, :])

    wlin_p = jnp.zeros((F, _LANE), f32).at[:, 0].set(params["w_lin"].astype(f32)[0, :])
    blin_p = jnp.zeros((1, _LANE), f32).at[0, 0].set(params["b_lin"].astype(f32)[0])

    x = batches.astype(f32)                          # keep batch_first, no transpose

    TB = B if B <= 8 else 8                          # batch tile (sublane-legal)
    nb = pl.cdiv(B, TB)

    dec_full, h_full, c_full = pl.pallas_call(
        _encoder_kernel,
        out_shape=(
            jax.ShapeDtypeStruct((B, _LANE), f32),
            jax.ShapeDtypeStruct((B, Hp), f32),
            jax.ShapeDtypeStruct((B, Hp), f32),
        ),
        grid=(nb,),
        in_specs=[
            pl.BlockSpec((TB, T, F), lambda i: (i, 0, 0)),
            pl.BlockSpec((F, G4), lambda i: (0, 0)),
            pl.BlockSpec((Hp, G4), lambda i: (0, 0)),
            pl.BlockSpec((1, G4), lambda i: (0, 0)),
            pl.BlockSpec((F, _LANE), lambda i: (0, 0)),
            pl.BlockSpec((1, _LANE), lambda i: (0, 0)),
        ],
        out_specs=(
            pl.BlockSpec((TB, _LANE), lambda i: (i, 0)),
            pl.BlockSpec((TB, Hp), lambda i: (i, 0)),
            pl.BlockSpec((TB, Hp), lambda i: (i, 0)),
        ),
        compiler_params=pltpu.CompilerParams(
            dimension_semantics=("parallel",),
            vmem_limit_bytes=32 * 1024 * 1024,
        ),
    )(x, wih_p, whh_p, b_p, wlin_p, blin_p)

    decoder_input = dec_full[:, :1][:, None, :]      # (B, 1, 1) == unsqueeze(1)
    h_out = h_full[:, :H][None, :, :]                # (n_layers=1, B, H)
    c_out = c_full[:, :H][None, :, :]
    return decoder_input, (h_out, c_out)


def _reference_forward(batches, params):
    """Pure-JAX reference of the PyTorch forward for validation."""
    B, T, F = batches.shape
    H = params["w_hh"].shape[1]
    h = jnp.zeros((B, H), jnp.float32)
    c = jnp.zeros((B, H), jnp.float32)
    for t in range(T):
        x_t = batches[:, t, :]
        gates = (x_t @ params["w_ih"].T + params["b_ih"]
                 + h @ params["w_hh"].T + params["b_hh"])
        i_g = jax.nn.sigmoid(gates[:, 0 * H:1 * H])
        f_g = jax.nn.sigmoid(gates[:, 1 * H:2 * H])
        g_g = jnp.tanh(gates[:, 2 * H:3 * H])
        o_g = jax.nn.sigmoid(gates[:, 3 * H:4 * H])
        c = f_g * c + i_g * g_g
        h = o_g * jnp.tanh(c)
    dec = (batches[:, -1, :] @ params["w_lin"].T + params["b_lin"])[:, None, :]
    return dec, (h[None], c[None])


def init_params(key, n_features, n_hidden):
    """Deterministic init matching PyTorch LSTM/Linear parameter shapes."""
    k1, k2, k3, k4, k5, k6 = jax.random.split(key, 6)
    s = 1.0 / jnp.sqrt(n_hidden)
    sl = 1.0 / jnp.sqrt(n_features)
    return {
        "w_ih": jax.random.uniform(k1, (4 * n_hidden, n_features), jnp.float32, -s, s),
        "w_hh": jax.random.uniform(k2, (4 * n_hidden, n_hidden), jnp.float32, -s, s),
        "b_ih": jax.random.uniform(k3, (4 * n_hidden,), jnp.float32, -s, s),
        "b_hh": jax.random.uniform(k4, (4 * n_hidden,), jnp.float32, -s, s),
        "w_lin": jax.random.uniform(k5, (1, n_features), jnp.float32, -sl, sl),
        "b_lin": jax.random.uniform(k6, (1,), jnp.float32, -sl, sl),
    }


if __name__ == "__main__":
    B, T, F, H = 2, 8, 4, 32  # batch, seq_len, n_features, n_hidden
    key = jax.random.PRNGKey(0)
    kx, kp = jax.random.split(key)
    batches = jax.random.normal(kx, (B, T, F), dtype=jnp.float32)
    params = init_params(kp, F, H)

    dec, (h_out, c_out) = encoder_forward(batches, params)
    jax.block_until_ready((dec, h_out, c_out))

    dec_r, (h_r, c_r) = _reference_forward(batches, params)
    assert dec.shape == (B, 1, 1)
    assert h_out.shape == (1, B, H) and c_out.shape == (1, B, H)
    assert jnp.allclose(dec, dec_r, atol=1e-4)
    assert jnp.allclose(h_out, h_r, atol=1e-4)
    assert jnp.allclose(c_out, c_r, atol=1e-4)

    print("KERNEL_OK")
</pallas_src>

<mosaic_0001>
module attributes {stable_mosaic.version = 11 : i64} {
  func.func @_encoder_kernel(%arg0: i32, %arg1: memref<2x8x4xf32, #tpu.memory_space<vmem>>, %arg2: memref<4x512xf32, #tpu.memory_space<vmem>>, %arg3: memref<128x512xf32, #tpu.memory_space<vmem>>, %arg4: memref<1x512xf32, #tpu.memory_space<vmem>>, %arg5: memref<4x128xf32, #tpu.memory_space<vmem>>, %arg6: memref<1x128xf32, #tpu.memory_space<vmem>>, %arg7: memref<2x128xf32, #tpu.memory_space<vmem>>, %arg8: memref<2x128xf32, #tpu.memory_space<vmem>>, %arg9: memref<2x128xf32, #tpu.memory_space<vmem>>) attributes {dimension_semantics = [#tpu.dimension_semantics<parallel>], iteration_bounds = array<i64: 1>, scalar_prefetch = 0 : i64, scratch_operands = 0 : i64, tpu.core_type = #tpu.core_type<tc>, window_params = [{transform_indices = @transform_0, window_bounds = array<i64: 2, 8, 4>}, {pipeline_mode = #tpu.pipeline_mode<synchronous>, transform_indices = @transform_1, window_bounds = array<i64: 4, 512>}, {pipeline_mode = #tpu.pipeline_mode<synchronous>, transform_indices = @transform_2, window_bounds = array<i64: 128, 512>}, {pipeline_mode = #tpu.pipeline_mode<synchronous>, transform_indices = @transform_3, window_bounds = array<i64: 1, 512>}, {pipeline_mode = #tpu.pipeline_mode<synchronous>, transform_indices = @transform_4, window_bounds = array<i64: 4, 128>}, {pipeline_mode = #tpu.pipeline_mode<synchronous>, transform_indices = @transform_5, window_bounds = array<i64: 1, 128>}, {transform_indices = @transform_6, window_bounds = array<i64: 2, 128>}, {transform_indices = @transform_7, window_bounds = array<i64: 2, 128>}, {transform_indices = @transform_8, window_bounds = array<i64: 2, 128>}]} {
    %c0 = arith.constant 0 : index
    %c0_0 = arith.constant 0 : index
    %c0_1 = arith.constant 0 : index
    %0 = vector.load %arg1[%c0, %c0_0, %c0_1] : memref<2x8x4xf32, #tpu.memory_space<vmem>>, vector<2x8x4xf32>
    %c0_2 = arith.constant 0 : index
    %c0_3 = arith.constant 0 : index
    %1 = vector.load %arg2[%c0_2, %c0_3] : memref<4x512xf32, #tpu.memory_space<vmem>>, vector<4x512xf32>
    %c0_4 = arith.constant 0 : index
    %c0_5 = arith.constant 0 : index
    %2 = vector.load %arg3[%c0_4, %c0_5] : memref<128x512xf32, #tpu.memory_space<vmem>>, vector<128x512xf32>
    %c0_6 = arith.constant 0 : index
    %c0_7 = arith.constant 0 : index
    %3 = vector.load %arg4[%c0_6, %c0_7] : memref<1x512xf32, #tpu.memory_space<vmem>>, vector<1x512xf32>
    %4 = vector.shape_cast %0 : vector<2x8x4xf32> to vector<16x4xf32>
    %cst = arith.constant dense<0.000000e+00> : vector<16x512xf32>
    %5 = tpu.matmul %4, %1, %cst {dimension_numbers = #tpu.dot_dimension_numbers<[1], [0], [0], [1], [0, 0, 1, 1], [], []>} : vector<16x4xf32>, vector<4x512xf32>, vector<16x512xf32> -> vector<16x512xf32>
    %6 = vector.broadcast %3 : vector<1x512xf32> to vector<16x512xf32>
    %7 = arith.addf %5, %6 : vector<16x512xf32>
    %8 = vector.shape_cast %7 : vector<16x512xf32> to vector<2x8x512xf32>
    %cst_8 = arith.constant 0.000000e+00 : f32
    %9 = vector.broadcast %cst_8 : f32 to vector<2x128xf32>
    %cst_9 = arith.constant 0.000000e+00 : f32
    %10 = vector.broadcast %cst_9 : f32 to vector<2x128xf32>
    %11 = vector.extract_strided_slice %8 {offsets = [0, 0, 0], sizes = [2, 1, 512], strides = [1, 1, 1]} : vector<2x8x512xf32> to vector<2x1x512xf32>
    %12 = vector.shape_cast %11 : vector<2x1x512xf32> to vector<2x512xf32>
    %cst_10 = arith.constant dense<0.000000e+00> : vector<2x512xf32>
    %13 = tpu.matmul %9, %2, %cst_10 {dimension_numbers = #tpu.dot_dimension_numbers<[1], [0], [0], [1], [0, 0, 1, 1], [], []>} : vector<2x128xf32>, vector<128x512xf32>, vector<2x512xf32> -> vector<2x512xf32>
    %14 = arith.addf %12, %13 : vector<2x512xf32>
    %15 = vector.extract_strided_slice %14 {offsets = [0, 0], sizes = [2, 128], strides = [1, 1]} : vector<2x512xf32> to vector<2x128xf32>
    %16 = arith.negf %15 : vector<2x128xf32>
    %17 = math.exp %16 : vector<2x128xf32>
    %cst_11 = arith.constant 1.000000e+00 : f32
    %18 = vector.broadcast %cst_11 : f32 to vector<2x128xf32>
    %19 = arith.addf %18, %17 : vector<2x128xf32>
    %20 = arith.divf %18, %19 : vector<2x128xf32>
    %21 = vector.extract_strided_slice %14 {offsets = [0, 128], sizes = [2, 128], strides = [1, 1]} : vector<2x512xf32> to vector<2x128xf32>
    %22 = arith.negf %21 : vector<2x128xf32>
    %23 = math.exp %22 : vector<2x128xf32>
    %cst_12 = arith.constant 1.000000e+00 : f32
    %24 = vector.broadcast %cst_12 : f32 to vector<2x128xf32>
    %25 = arith.addf %24, %23 : vector<2x128xf32>
    %26 = arith.divf %24, %25 : vector<2x128xf32>
    %27 = vector.extract_strided_slice %14 {offsets = [0, 256], sizes = [2, 128], strides = [1, 1]} : vector<2x512xf32> to vector<2x128xf32>
    %28 = math.tanh %27 : vector<2x128xf32>
    %29 = vector.extract_strided_slice %14 {offsets = [0, 384], sizes = [2, 128], strides = [1, 1]} : vector<2x512xf32> to vector<2x128xf32>
    %30 = arith.negf %29 : vector<2x128xf32>
    %31 = math.exp %30 : vector<2x128xf32>
    %cst_13 = arith.constant 1.000000e+00 : f32
    %32 = vector.broadcast %cst_13 : f32 to vector<2x128xf32>
    %33 = arith.addf %32, %31 : vector<2x128xf32>
    %34 = arith.divf %32, %33 : vector<2x128xf32>
    %35 = arith.mulf %26, %10 : vector<2x128xf32>
    %36 = arith.mulf %20, %28 : vector<2x128xf32>
    %37 = arith.addf %35, %36 : vector<2x128xf32>
    %38 = math.tanh %37 : vector<2x128xf32>
    %39 = arith.mulf %34, %38 : vector<2x128xf32>
    %40 = vector.extract_strided_slice %8 {offsets = [0, 1, 0], sizes = [2, 1, 512], strides = [1, 1, 1]} : vector<2x8x512xf32> to vector<2x1x512xf32>
    %41 = vector.shape_cast %40 : vector<2x1x512xf32> to vector<2x512xf32>
    %cst_14 = arith.constant dense<0.000000e+00> : vector<2x512xf32>
    %42 = tpu.matmul %39, %2, %cst_14 {dimension_numbers = #tpu.dot_dimension_numbers<[1], [0], [0], [1], [0, 0, 1, 1], [], []>} : vector<2x128xf32>, vector<128x512xf32>, vector<2x512xf32> -> vector<2x512xf32>
    %43 = arith.addf %41, %42 : vector<2x512xf32>
    %44 = vector.extract_strided_slice %43 {offsets = [0, 0], sizes = [2, 128], strides = [1, 1]} : vector<2x512xf32> to vector<2x128xf32>
    %45 = arith.negf %44 : vector<2x128xf32>
    %46 = math.exp %45 : vector<2x128xf32>
    %cst_15 = arith.constant 1.000000e+00 : f32
    %47 = vector.broadcast %cst_15 : f32 to vector<2x128xf32>
    %48 = arith.addf %47, %46 : vector<2x128xf32>
    %49 = arith.divf %47, %48 : vector<2x128xf32>
    %50 = vector.extract_strided_slice %43 {offsets = [0, 128], sizes = [2, 128], strides = [1, 1]} : vector<2x512xf32> to vector<2x128xf32>
    %51 = arith.negf %50 : vector<2x128xf32>
    %52 = math.exp %51 : vector<2x128xf32>
    %cst_16 = arith.constant 1.000000e+00 : f32
    %53 = vector.broadcast %cst_16 : f32 to vector<2x128xf32>
    %54 = arith.addf %53, %52 : vector<2x128xf32>
    %55 = arith.divf %53, %54 : vector<2x128xf32>
    %56 = vector.extract_strided_slice %43 {offsets = [0, 256], sizes = [2, 128], strides = [1, 1]} : vector<2x512xf32> to vector<2x128xf32>
    %57 = math.tanh %56 : vector<2x128xf32>
    %58 = vector.extract_strided_slice %43 {offsets = [0, 384], sizes = [2, 128], strides = [1, 1]} : vector<2x512xf32> to vector<2x128xf32>
    %59 = arith.negf %58 : vector<2x128xf32>
    %60 = math.exp %59 : vector<2x128xf32>
    %cst_17 = arith.constant 1.000000e+00 : f32
    %61 = vector.broadcast %cst_17 : f32 to vector<2x128xf32>
    %62 = arith.addf %61, %60 : vector<2x128xf32>
    %63 = arith.divf %61, %62 : vector<2x128xf32>
    %64 = arith.mulf %55, %37 : vector<2x128xf32>
    %65 = arith.mulf %49, %57 : vector<2x128xf32>
    %66 = arith.addf %64, %65 : vector<2x128xf32>
    %67 = math.tanh %66 : vector<2x128xf32>
    %68 = arith.mulf %63, %67 : vector<2x128xf32>
    %69 = vector.extract_strided_slice %8 {offsets = [0, 2, 0], sizes = [2, 1, 512], strides = [1, 1, 1]} : vector<2x8x512xf32> to vector<2x1x512xf32>
    %70 = vector.shape_cast %69 : vector<2x1x512xf32> to vector<2x512xf32>
    %cst_18 = arith.constant dense<0.000000e+00> : vector<2x512xf32>
    %71 = tpu.matmul %68, %2, %cst_18 {dimension_numbers = #tpu.dot_dimension_numbers<[1], [0], [0], [1], [0, 0, 1, 1], [], []>} : vector<2x128xf32>, vector<128x512xf32>, vector<2x512xf32> -> vector<2x512xf32>
    %72 = arith.addf %70, %71 : vector<2x512xf32>
    %73 = vector.extract_strided_slice %72 {offsets = [0, 0], sizes = [2, 128], strides = [1, 1]} : vector<2x512xf32> to vector<2x128xf32>
    %74 = arith.negf %73 : vector<2x128xf32>
    %75 = math.exp %74 : vector<2x128xf32>
    %cst_19 = arith.constant 1.000000e+00 : f32
    %76 = vector.broadcast %cst_19 : f32 to vector<2x128xf32>
    %77 = arith.addf %76, %75 : vector<2x128xf32>
    %78 = arith.divf %76, %77 : vector<2x128xf32>
    %79 = vector.extract_strided_slice %72 {offsets = [0, 128], sizes = [2, 128], strides = [1, 1]} : vector<2x512xf32> to vector<2x128xf32>
    %80 = arith.negf %79 : vector<2x128xf32>
    %81 = math.exp %80 : vector<2x128xf32>
    %cst_20 = arith.constant 1.000000e+00 : f32
    %82 = vector.broadcast %cst_20 : f32 to vector<2x128xf32>
    %83 = arith.addf %82, %81 : vector<2x128xf32>
    %84 = arith.divf %82, %83 : vector<2x128xf32>
    %85 = vector.extract_strided_slice %72 {offsets = [0, 256], sizes = [2, 128], strides = [1, 1]} : vector<2x512xf32> to vector<2x128xf32>
    %86 = math.tanh %85 : vector<2x128xf32>
    %87 = vector.extract_strided_slice %72 {offsets = [0, 384], sizes = [2, 128], strides = [1, 1]} : vector<2x512xf32> to vector<2x128xf32>
    %88 = arith.negf %87 : vector<2x128xf32>
    %89 = math.exp %88 : vector<2x128xf32>
    %cst_21 = arith.constant 1.000000e+00 : f32
    %90 = vector.broadcast %cst_21 : f32 to vector<2x128xf32>
    %91 = arith.addf %90, %89 : vector<2x128xf32>
    %92 = arith.divf %90, %91 : vector<2x128xf32>
    %93 = arith.mulf %84, %66 : vector<2x128xf32>
    %94 = arith.mulf %78, %86 : vector<2x128xf32>
    %95 = arith.addf %93, %94 : vector<2x128xf32>
    %96 = math.tanh %95 : vector<2x128xf32>
    %97 = arith.mulf %92, %96 : vector<2x128xf32>
    %98 = vector.extract_strided_slice %8 {offsets = [0, 3, 0], sizes = [2, 1, 512], strides = [1, 1, 1]} : vector<2x8x512xf32> to vector<2x1x512xf32>
    %99 = vector.shape_cast %98 : vector<2x1x512xf32> to vector<2x512xf32>
    %cst_22 = arith.constant dense<0.000000e+00> : vector<2x512xf32>
    %100 = tpu.matmul %97, %2, %cst_22 {dimension_numbers = #tpu.dot_dimension_numbers<[1], [0], [0], [1], [0, 0, 1, 1], [], []>} : vector<2x128xf32>, vector<128x512xf32>, vector<2x512xf32> -> vector<2x512xf32>
    %101 = arith.addf %99, %100 : vector<2x512xf32>
    %102 = vector.extract_strided_slice %101 {offsets = [0, 0], sizes = [2, 128], strides = [1, 1]} : vector<2x512xf32> to vector<2x128xf32>
    %103 = arith.negf %102 : vector<2x128xf32>
    %104 = math.exp %103 : vector<2x128xf32>
    %cst_23 = arith.constant 1.000000e+00 : f32
    %105 = vector.broadcast %cst_23 : f32 to vector<2x128xf32>
    %106 = arith.addf %105, %104 : vector<2x128xf32>
    %107 = arith.divf %105, %106 : vector<2x128xf32>
    %108 = vector.extract_strided_slice %101 {offsets = [0, 128], sizes = [2, 128], strides = [1, 1]} : vector<2x512xf32> to vector<2x128xf32>
    %109 = arith.negf %108 : vector<2x128xf32>
    %110 = math.exp %109 : vector<2x128xf32>
    %cst_24 = arith.constant 1.000000e+00 : f32
    %111 = vector.broadcast %cst_24 : f32 to vector<2x128xf32>
    %112 = arith.addf %111, %110 : vector<2x128xf32>
    %113 = arith.divf %111, %112 : vector<2x128xf32>
    %114 = vector.extract_strided_slice %101 {offsets = [0, 256], sizes = [2, 128], strides = [1, 1]} : vector<2x512xf32> to vector<2x128xf32>
    %115 = math.tanh %114 : vector<2x128xf32>
    %116 = vector.extract_strided_slice %101 {offsets = [0, 384], sizes = [2, 128], strides = [1, 1]} : vector<2x512xf32> to vector<2x128xf32>
    %117 = arith.negf %116 : vector<2x128xf32>
    %118 = math.exp %117 : vector<2x128xf32>
    %cst_25 = arith.constant 1.000000e+00 : f32
    %119 = vector.broadcast %cst_25 : f32 to vector<2x128xf32>
    %120 = arith.addf %119, %118 : vector<2x128xf32>
    %121 = arith.divf %119, %120 : vector<2x128xf32>
    %122 = arith.mulf %113, %95 : vector<2x128xf32>
    %123 = arith.mulf %107, %115 : vector<2x128xf32>
    %124 = arith.addf %122, %123 : vector<2x128xf32>
    %125 = math.tanh %124 : vector<2x128xf32>
    %126 = arith.mulf %121, %125 : vector<2x128xf32>
    %127 = vector.extract_strided_slice %8 {offsets = [0, 4, 0], sizes = [2, 1, 512], strides = [1, 1, 1]} : vector<2x8x512xf32> to vector<2x1x512xf32>
    %128 = vector.shape_cast %127 : vector<2x1x512xf32> to vector<2x512xf32>
    %cst_26 = arith.constant dense<0.000000e+00> : vector<2x512xf32>
    %129 = tpu.matmul %126, %2, %cst_26 {dimension_numbers = #tpu.dot_dimension_numbers<[1], [0], [0], [1], [0, 0, 1, 1], [], []>} : vector<2x128xf32>, vector<128x512xf32>, vector<2x512xf32> -> vector<2x512xf32>
    %130 = arith.addf %128, %129 : vector<2x512xf32>
    %131 = vector.extract_strided_slice %130 {offsets = [0, 0], sizes = [2, 128], strides = [1, 1]} : vector<2x512xf32> to vector<2x128xf32>
    %132 = arith.negf %131 : vector<2x128xf32>
    %133 = math.exp %132 : vector<2x128xf32>
    %cst_27 = arith.constant 1.000000e+00 : f32
    %134 = vector.broadcast %cst_27 : f32 to vector<2x128xf32>
    %135 = arith.addf %134, %133 : vector<2x128xf32>
    %136 = arith.divf %134, %135 : vector<2x128xf32>
    %137 = vector.extract_strided_slice %130 {offsets = [0, 128], sizes = [2, 128], strides = [1, 1]} : vector<2x512xf32> to vector<2x128xf32>
    %138 = arith.negf %137 : vector<2x128xf32>
    %139 = math.exp %138 : vector<2x128xf32>
    %cst_28 = arith.constant 1.000000e+00 : f32
    %140 = vector.broadcast %cst_28 : f32 to vector<2x128xf32>
    %141 = arith.addf %140, %139 : vector<2x128xf32>
    %142 = arith.divf %140, %141 : vector<2x128xf32>
    %143 = vector.extract_strided_slice %130 {offsets = [0, 256], sizes = [2, 128], strides = [1, 1]} : vector<2x512xf32> to vector<2x128xf32>
    %144 = math.tanh %143 : vector<2x128xf32>
    %145 = vector.extract_strided_slice %130 {offsets = [0, 384], sizes = [2, 128], strides = [1, 1]} : vector<2x512xf32> to vector<2x128xf32>
    %146 = arith.negf %145 : vector<2x128xf32>
    %147 = math.exp %146 : vector<2x128xf32>
    %cst_29 = arith.constant 1.000000e+00 : f32
    %148 = vector.broadcast %cst_29 : f32 to vector<2x128xf32>
    %149 = arith.addf %148, %147 : vector<2x128xf32>
    %150 = arith.divf %148, %149 : vector<2x128xf32>
    %151 = arith.mulf %142, %124 : vector<2x128xf32>
    %152 = arith.mulf %136, %144 : vector<2x128xf32>
    %153 = arith.addf %151, %152 : vector<2x128xf32>
    %154 = math.tanh %153 : vector<2x128xf32>
    %155 = arith.mulf %150, %154 : vector<2x128xf32>
    %156 = vector.extract_strided_slice %8 {offsets = [0, 5, 0], sizes = [2, 1, 512], strides = [1, 1, 1]} : vector<2x8x512xf32> to vector<2x1x512xf32>
    %157 = vector.shape_cast %156 : vector<2x1x512xf32> to vector<2x512xf32>
    %cst_30 = arith.constant dense<0.000000e+00> : vector<2x512xf32>
    %158 = tpu.matmul %155, %2, %cst_30 {dimension_numbers = #tpu.dot_dimension_numbers<[1], [0], [0], [1], [0, 0, 1, 1], [], []>} : vector<2x128xf32>, vector<128x512xf32>, vector<2x512xf32> -> vector<2x512xf32>
    %159 = arith.addf %157, %158 : vector<2x512xf32>
    %160 = vector.extract_strided_slice %159 {offsets = [0, 0], sizes = [2, 128], strides = [1, 1]} : vector<2x512xf32> to vector<2x128xf32>
    %161 = arith.negf %160 : vector<2x128xf32>
    %162 = math.exp %161 : vector<2x128xf32>
    %cst_31 = arith.constant 1.000000e+00 : f32
    %163 = vector.broadcast %cst_31 : f32 to vector<2x128xf32>
    %164 = arith.addf %163, %162 : vector<2x128xf32>
    %165 = arith.divf %163, %164 : vector<2x128xf32>
    %166 = vector.extract_strided_slice %159 {offsets = [0, 128], sizes = [2, 128], strides = [1, 1]} : vector<2x512xf32> to vector<2x128xf32>
    %167 = arith.negf %166 : vector<2x128xf32>
    %168 = math.exp %167 : vector<2x128xf32>
    %cst_32 = arith.constant 1.000000e+00 : f32
    %169 = vector.broadcast %cst_32 : f32 to vector<2x128xf32>
    %170 = arith.addf %169, %168 : vector<2x128xf32>
    %171 = arith.divf %169, %170 : vector<2x128xf32>
    %172 = vector.extract_strided_slice %159 {offsets = [0, 256], sizes = [2, 128], strides = [1, 1]} : vector<2x512xf32> to vector<2x128xf32>
    %173 = math.tanh %172 : vector<2x128xf32>
    %174 = vector.extract_strided_slice %159 {offsets = [0, 384], sizes = [2, 128], strides = [1, 1]} : vector<2x512xf32> to vector<2x128xf32>
    %175 = arith.negf %174 : vector<2x128xf32>
    %176 = math.exp %175 : vector<2x128xf32>
    %cst_33 = arith.constant 1.000000e+00 : f32
    %177 = vector.broadcast %cst_33 : f32 to vector<2x128xf32>
    %178 = arith.addf %177, %176 : vector<2x128xf32>
    %179 = arith.divf %177, %178 : vector<2x128xf32>
    %180 = arith.mulf %171, %153 : vector<2x128xf32>
    %181 = arith.mulf %165, %173 : vector<2x128xf32>
    %182 = arith.addf %180, %181 : vector<2x128xf32>
    %183 = math.tanh %182 : vector<2x128xf32>
    %184 = arith.mulf %179, %183 : vector<2x128xf32>
    %185 = vector.extract_strided_slice %8 {offsets = [0, 6, 0], sizes = [2, 1, 512], strides = [1, 1, 1]} : vector<2x8x512xf32> to vector<2x1x512xf32>
    %186 = vector.shape_cast %185 : vector<2x1x512xf32> to vector<2x512xf32>
    %cst_34 = arith.constant dense<0.000000e+00> : vector<2x512xf32>
    %187 = tpu.matmul %184, %2, %cst_34 {dimension_numbers = #tpu.dot_dimension_numbers<[1], [0], [0], [1], [0, 0, 1, 1], [], []>} : vector<2x128xf32>, vector<128x512xf32>, vector<2x512xf32> -> vector<2x512xf32>
    %188 = arith.addf %186, %187 : vector<2x512xf32>
    %189 = vector.extract_strided_slice %188 {offsets = [0, 0], sizes = [2, 128], strides = [1, 1]} : vector<2x512xf32> to vector<2x128xf32>
    %190 = arith.negf %189 : vector<2x128xf32>
    %191 = math.exp %190 : vector<2x128xf32>
    %cst_35 = arith.constant 1.000000e+00 : f32
    %192 = vector.broadcast %cst_35 : f32 to vector<2x128xf32>
    %193 = arith.addf %192, %191 : vector<2x128xf32>
    %194 = arith.divf %192, %193 : vector<2x128xf32>
    %195 = vector.extract_strided_slice %188 {offsets = [0, 128], sizes = [2, 128], strides = [1, 1]} : vector<2x512xf32> to vector<2x128xf32>
    %196 = arith.negf %195 : vector<2x128xf32>
    %197 = math.exp %196 : vector<2x128xf32>
    %cst_36 = arith.constant 1.000000e+00 : f32
    %198 = vector.broadcast %cst_36 : f32 to vector<2x128xf32>
    %199 = arith.addf %198, %197 : vector<2x128xf32>
    %200 = arith.divf %198, %199 : vector<2x128xf32>
    %201 = vector.extract_strided_slice %188 {offsets = [0, 256], sizes = [2, 128], strides = [1, 1]} : vector<2x512xf32> to vector<2x128xf32>
    %202 = math.tanh %201 : vector<2x128xf32>
    %203 = vector.extract_strided_slice %188 {offsets = [0, 384], sizes = [2, 128], strides = [1, 1]} : vector<2x512xf32> to vector<2x128xf32>
    %204 = arith.negf %203 : vector<2x128xf32>
    %205 = math.exp %204 : vector<2x128xf32>
    %cst_37 = arith.constant 1.000000e+00 : f32
    %206 = vector.broadcast %cst_37 : f32 to vector<2x128xf32>
    %207 = arith.addf %206, %205 : vector<2x128xf32>
    %208 = arith.divf %206, %207 : vector<2x128xf32>
    %209 = arith.mulf %200, %182 : vector<2x128xf32>
    %210 = arith.mulf %194, %202 : vector<2x128xf32>
    %211 = arith.addf %209, %210 : vector<2x128xf32>
    %212 = math.tanh %211 : vector<2x128xf32>
    %213 = arith.mulf %208, %212 : vector<2x128xf32>
    %214 = vector.extract_strided_slice %8 {offsets = [0, 7, 0], sizes = [2, 1, 512], strides = [1, 1, 1]} : vector<2x8x512xf32> to vector<2x1x512xf32>
    %215 = vector.shape_cast %214 : vector<2x1x512xf32> to vector<2x512xf32>
    %cst_38 = arith.constant dense<0.000000e+00> : vector<2x512xf32>
    %216 = tpu.matmul %213, %2, %cst_38 {dimension_numbers = #tpu.dot_dimension_numbers<[1], [0], [0], [1], [0, 0, 1, 1], [], []>} : vector<2x128xf32>, vector<128x512xf32>, vector<2x512xf32> -> vector<2x512xf32>
    %217 = arith.addf %215, %216 : vector<2x512xf32>
    %218 = vector.extract_strided_slice %217 {offsets = [0, 0], sizes = [2, 128], strides = [1, 1]} : vector<2x512xf32> to vector<2x128xf32>
    %219 = arith.negf %218 : vector<2x128xf32>
    %220 = math.exp %219 : vector<2x128xf32>
    %cst_39 = arith.constant 1.000000e+00 : f32
    %221 = vector.broadcast %cst_39 : f32 to vector<2x128xf32>
    %222 = arith.addf %221, %220 : vector<2x128xf32>
    %223 = arith.divf %221, %222 : vector<2x128xf32>
    %224 = vector.extract_strided_slice %217 {offsets = [0, 128], sizes = [2, 128], strides = [1, 1]} : vector<2x512xf32> to vector<2x128xf32>
    %225 = arith.negf %224 : vector<2x128xf32>
    %226 = math.exp %225 : vector<2x128xf32>
    %cst_40 = arith.constant 1.000000e+00 : f32
    %227 = vector.broadcast %cst_40 : f32 to vector<2x128xf32>
    %228 = arith.addf %227, %226 : vector<2x128xf32>
    %229 = arith.divf %227, %228 : vector<2x128xf32>
    %230 = vector.extract_strided_slice %217 {offsets = [0, 256], sizes = [2, 128], strides = [1, 1]} : vector<2x512xf32> to vector<2x128xf32>
    %231 = math.tanh %230 : vector<2x128xf32>
    %232 = vector.extract_strided_slice %217 {offsets = [0, 384], sizes = [2, 128], strides = [1, 1]} : vector<2x512xf32> to vector<2x128xf32>
    %233 = arith.negf %232 : vector<2x128xf32>
    %234 = math.exp %233 : vector<2x128xf32>
    %cst_41 = arith.constant 1.000000e+00 : f32
    %235 = vector.broadcast %cst_41 : f32 to vector<2x128xf32>
    %236 = arith.addf %235, %234 : vector<2x128xf32>
    %237 = arith.divf %235, %236 : vector<2x128xf32>
    %238 = arith.mulf %229, %211 : vector<2x128xf32>
    %239 = arith.mulf %223, %231 : vector<2x128xf32>
    %240 = arith.addf %238, %239 : vector<2x128xf32>
    %241 = math.tanh %240 : vector<2x128xf32>
    %242 = arith.mulf %237, %241 : vector<2x128xf32>
    %c0_42 = arith.constant 0 : index
    %c0_43 = arith.constant 0 : index
    %243 = vector.load %arg8[%c0_42, %c0_43] : memref<2x128xf32, #tpu.memory_space<vmem>>, vector<2x128xf32>
    tpu.vector_store %arg8[%c0_42, %c0_43], %242 {strides = array<i32>} : memref<2x128xf32, #tpu.memory_space<vmem>>, vector<2x128xf32>,
    %c0_44 = arith.constant 0 : index
    %c0_45 = arith.constant 0 : index
    %244 = vector.load %arg9[%c0_44, %c0_45] : memref<2x128xf32, #tpu.memory_space<vmem>>, vector<2x128xf32>
    tpu.vector_store %arg9[%c0_44, %c0_45], %240 {strides = array<i32>} : memref<2x128xf32, #tpu.memory_space<vmem>>, vector<2x128xf32>,
    %245 = vector.extract_strided_slice %0 {offsets = [0, 7, 0], sizes = [2, 1, 4], strides = [1, 1, 1]} : vector<2x8x4xf32> to vector<2x1x4xf32>
    %246 = vector.shape_cast %245 : vector<2x1x4xf32> to vector<2x4xf32>
    %c0_46 = arith.constant 0 : index
    %c0_47 = arith.constant 0 : index
    %247 = vector.load %arg5[%c0_46, %c0_47] : memref<4x128xf32, #tpu.memory_space<vmem>>, vector<4x128xf32>
    %cst_48 = arith.constant dense<0.000000e+00> : vector<2x128xf32>
    %248 = tpu.matmul %246, %247, %cst_48 {dimension_numbers = #tpu.dot_dimension_numbers<[1], [0], [0], [1], [0, 0, 1, 1], [], []>} : vector<2x4xf32>, vector<4x128xf32>, vector<2x128xf32> -> vector<2x128xf32>
    %c0_49 = arith.constant 0 : index
    %c0_50 = arith.constant 0 : index
    %249 = vector.load %arg6[%c0_49, %c0_50] : memref<1x128xf32, #tpu.memory_space<vmem>>, vector<1x128xf32>
    %250 = vector.broadcast %249 : vector<1x128xf32> to vector<2x128xf32>
    %251 = arith.addf %248, %250 : vector<2x128xf32>
    %c0_51 = arith.constant 0 : index
    %c0_52 = arith.constant 0 : index
    %252 = vector.load %arg7[%c0_51, %c0_52] : memref<2x128xf32, #tpu.memory_space<vmem>>, vector<2x128xf32>
    tpu.vector_store %arg7[%c0_51, %c0_52], %251 {strides = array<i32>} : memref<2x128xf32, #tpu.memory_space<vmem>>, vector<2x128xf32>,
    return
  }
  func.func @transform_0(%arg0: i32) -> (i32, i32, i32) {
    %c0_i32 = arith.constant 0 : i32
    %c0_i32_0 = arith.constant 0 : i32
    %c0_i32_1 = arith.constant 0 : i32
    return %arg0, %c0_i32, %c0_i32_0 : i32, i32, i32
  }
  func.func @transform_1(%arg0: i32) -> (i32, i32) {
    %c0_i32 = arith.constant 0 : i32
    %c0_i32_0 = arith.constant 0 : i32
    %c0_i32_1 = arith.constant 0 : i32
    return %c0_i32, %c0_i32_0 : i32, i32
  }
  func.func @transform_2(%arg0: i32) -> (i32, i32) {
    %c0_i32 = arith.constant 0 : i32
    %c0_i32_0 = arith.constant 0 : i32
    %c0_i32_1 = arith.constant 0 : i32
    return %c0_i32, %c0_i32_0 : i32, i32
  }
  func.func @transform_3(%arg0: i32) -> (i32, i32) {
    %c0_i32 = arith.constant 0 : i32
    %c0_i32_0 = arith.constant 0 : i32
    %c0_i32_1 = arith.constant 0 : i32
    return %c0_i32, %c0_i32_0 : i32, i32
  }
  func.func @transform_4(%arg0: i32) -> (i32, i32) {
    %c0_i32 = arith.constant 0 : i32
    %c0_i32_0 = arith.constant 0 : i32
    %c0_i32_1 = arith.constant 0 : i32
    return %c0_i32, %c0_i32_0 : i32, i32
  }
  func.func @transform_5(%arg0: i32) -> (i32, i32) {
    %c0_i32 = arith.constant 0 : i32
    %c0_i32_0 = arith.constant 0 : i32
    %c0_i32_1 = arith.constant 0 : i32
    return %c0_i32, %c0_i32_0 : i32, i32
  }
  func.func @transform_6(%arg0: i32) -> (i32, i32) {
    %c0_i32 = arith.constant 0 : i32
    %c0_i32_0 = arith.constant 0 : i32
    return %arg0, %c0_i32 : i32, i32
  }
  func.func @transform_7(%arg0: i32) -> (i32, i32) {
    %c0_i32 = arith.constant 0 : i32
    %c0_i32_0 = arith.constant 0 : i32
    return %arg0, %c0_i32 : i32, i32
  }
  func.func @transform_8(%arg0: i32) -> (i32, i32) {
    %c0_i32 = arith.constant 0 : i32
    %c0_i32_0 = arith.constant 0 : i32
    return %arg0, %c0_i32 : i32, i32
  }
}

</mosaic_0001>

<llo_original>
// kernel: tpu_custom_call.1
$region0: #{tpu_custom_call.1}
  #allocation0 [shape = 'u32[]', space=smem, size = 0x4, offset = 0x4, fixed_abs, tag = 'smem constant byte address 0x4 - core index']
  #allocation1 [shape = 'u32[144,128]{1,0:T(1,128)}', space=vmem, size = 0x12000, scoped, tag = 'internal scratch']
  %s0 = inlined_call_operand.vmem [shape: f32[2,8,4], index: 0, kind: input, shape index: {}]
  %s1 = inlined_call_operand.vmem [shape: f32[4,512], index: 1, kind: input, shape index: {}]
  %s2 = inlined_call_operand.hbm [shape: f32[128,512], index: 2, kind: input, shape index: {}]
  %s3 = inlined_call_operand.vmem [shape: f32[1,512], index: 3, kind: input, shape index: {}]
  %s4 = inlined_call_operand.vmem [shape: f32[4,128], index: 4, kind: input, shape index: {}]
  %s5 = inlined_call_operand.vmem [shape: f32[1,128], index: 5, kind: input, shape index: {}]
  %s6 = inlined_call_operand.hbm [shape: f32[2,128], index: 6, kind: output, shape index: {0}]
  %s7 = inlined_call_operand.hbm [shape: f32[2,128], index: 7, kind: output, shape index: {1}]
  %s8 = inlined_call_operand.hbm [shape: f32[2,128], index: 8, kind: output, shape index: {2}]
  %9 = xla_tuple %s6, %s7, %s8
  %s10 = sld [smem:[#allocation0]]
  $region54: #{tpu_custom_call.1} parent=0
    _
  %s12 = ssub.s32 1, %s10
  %s13 = scalar_select 0, %s12, %s10
  $region1: #{tpu_custom_call.1} parent=0
    #allocation2 [shape = 'u8[262144]{0}', space=vmem, size = 0x40000, scoped, tag = 'input window, operand 2, single buffered']
    #allocation3 [shape = 's32[1]{0}', space=sflag, size = 0x4, scoped, tag = 'scoped memory for tpu_custom_call.1']
    #allocation4 [shape = 's32[1]{0}', space=sflag, size = 0x4, scoped, tag = 'scoped memory for tpu_custom_call.1']
    #allocation5 [shape = 'u8[1024]{0}', space=vmem, size = 0x400, scoped, tag = 'output window, operand 0, single buffered']
    #allocation6 [shape = 'u8[1024]{0}', space=vmem, size = 0x400, scoped, tag = 'output window, operand 1, single buffered']
    #allocation7 [shape = 's32[1]{0}', space=sflag, size = 0x4, scoped, tag = 'scoped memory for tpu_custom_call.1']
    #allocation8 [shape = 'u8[1024]{0}', space=vmem, size = 0x400, scoped, tag = 'output window, operand 2, single buffered']
    %14 = vsyncpa [#allocation3], 0
    %15 = vsyncpa [#allocation4], 0
    %16 = vsyncpa [#allocation7], 0
    // Predicated region
    $region2: #{tpu_custom_call.1} parent=1 // pred_check
      _
    $region3: #{tpu_custom_call.1} parent=1 // pred_check_branch
      %18 = sbr.rel (0) target = $region5
    $region4: #{tpu_custom_call.1} parent=1 // pred_region
      _
    $region5: #{tpu_custom_call.1} parent=1 // pred_fallthru
      _
    // Predicated region
    $region6: #{tpu_custom_call.1} parent=1 // pred_check
      _
    $region7: #{tpu_custom_call.1} parent=1 // pred_check_branch
      %20 = sbr.rel (0) target = $region9
    $region8: #{tpu_custom_call.1} parent=1 // pred_region
      _
    $region9: #{tpu_custom_call.1} parent=1 // pred_fallthru
      _
    // Predicated region
    $region10: #{tpu_custom_call.1} parent=1 // pred_check
      _
    $region11: #{tpu_custom_call.1} parent=1 // pred_check_branch
      %22 = sbr.rel (0) target = $region13
    $region12: #{tpu_custom_call.1} parent=1 // pred_region
      %s24 = ssub.s32 8192, 8192
      %25 = vsyncadd [#allocation3], %s24
      %s26 = sshll.u32 [#allocation2], 4
      %s27 = int_to_ptr.vmem [resolvable:$true] %s26
      %32 = dma.hbm_to_vmem [thread:$0]  %s2, 8192, %s27, [#allocation3], 512, 512, 32
    $region13: #{tpu_custom_call.1} parent=1 // pred_fallthru
      _
    // Predicated region
    $region14: #{tpu_custom_call.1} parent=1 // pred_check
      _
    $region15: #{tpu_custom_call.1} parent=1 // pred_check_branch
      %34 = sbr.rel (0) target = $region17
    $region16: #{tpu_custom_call.1} parent=1 // pred_region
      _
    $region17: #{tpu_custom_call.1} parent=1 // pred_fallthru
      _
    // Predicated region
    $region18: #{tpu_custom_call.1} parent=1 // pred_check
      _
    $region19: #{tpu_custom_call.1} parent=1 // pred_check_branch
      %36 = sbr.rel (0) target = $region21
    $region20: #{tpu_custom_call.1} parent=1 // pred_region
      _
    $region21: #{tpu_custom_call.1} parent=1 // pred_fallthru
      _
    // Predicated region
    $region22: #{tpu_custom_call.1} parent=1 // pred_check
      _
    $region23: #{tpu_custom_call.1} parent=1 // pred_check_branch
      %38 = sbr.rel (0) target = $region25
    $region24: #{tpu_custom_call.1} parent=1 // pred_region
      _
    $region25: #{tpu_custom_call.1} parent=1 // pred_fallthru
      _
    // Predicated region
    $region26: #{tpu_custom_call.1} parent=1 // pred_check
      _
    $region27: #{tpu_custom_call.1} parent=1 // pred_check_branch
      %40 = sbr.rel (0) target = $region29
    $region28: #{tpu_custom_call.1} parent=1 // pred_region
      %41 = dma.done [#allocation3], 8192
    $region29: #{tpu_custom_call.1} parent=1 // pred_fallthru
      _
    %v42 = vld [vmem:[%s0] sm:$0xff]
    %v43 = vld [vmem:[%s0 + $0x8] sm:$0xff]
    %v44 = vld [vmem:[%s1] sm:$0xff]
    %v45 = vld [vmem:[%s1 + $0x8] sm:$0xff]
    %v46 = vld [vmem:[#allocation2] sm:$0xff]
    %v47 = vld [vmem:[#allocation2 + $0x8] sm:$0xff]
    %v48 = vld [vmem:[#allocation2 + $0x10] sm:$0xff]
    %v49 = vld [vmem:[#allocation2 + $0x18] sm:$0xff]
    %v50 = vld [vmem:[#allocation2 + $0x20] sm:$0xff]
    %v51 = vld [vmem:[#allocation2 + $0x28] sm:$0xff]
    %v52 = vld [vmem:[#allocation2 + $0x30] sm:$0xff]
    %v53 = vld [vmem:[#allocation2 + $0x38] sm:$0xff]
    %v54 = vld [vmem:[#allocation2 + $0x40] sm:$0xff]
    %v55 = vld [vmem:[#allocation2 + $0x48] sm:$0xff]
    %v56 = vld [vmem:[#allocation2 + $0x50] sm:$0xff]
    %v57 = vld [vmem:[#allocation2 + $0x58] sm:$0xff]
    %v58 = vld [vmem:[#allocation2 + $0x60] sm:$0xff]
    %v59 = vld [vmem:[#allocation2 + $0x68] sm:$0xff]
    %v60 = vld [vmem:[#allocation2 + $0x70] sm:$0xff]
    %v61 = vld [vmem:[#allocation2 + $0x78] sm:$0xff]
    %v62 = vld [vmem:[#allocation2 + $0x80] sm:$0xff]
    %v63 = vld [vmem:[#allocation2 + $0x88] sm:$0xff]
    %v64 = vld [vmem:[#allocation2 + $0x90] sm:$0xff]
    %v65 = vld [vmem:[#allocation2 + $0x98] sm:$0xff]
    %v66 = vld [vmem:[#allocation2 + $0xa0] sm:$0xff]
    %v67 = vld [vmem:[#allocation2 + $0xa8] sm:$0xff]
    %v68 = vld [vmem:[#allocation2 + $0xb0] sm:$0xff]
    %v69 = vld [vmem:[#allocation2 + $0xb8] sm:$0xff]
    %v70 = vld [vmem:[#allocation2 + $0xc0] sm:$0xff]
    %v71 = vld [vmem:[#allocation2 + $0xc8] sm:$0xff]
    %v72 = vld [vmem:[#allocation2 + $0xd0] sm:$0xff]
    %v73 = vld [vmem:[#allocation2 + $0xd8] sm:$0xff]
    %v74 = vld [vmem:[#allocation2 + $0xe0] sm:$0xff]
    %v75 = vld [vmem:[#allocation2 + $0xe8] sm:$0xff]
    %v76 = vld [vmem:[#allocation2 + $0xf0] sm:$0xff]
    %v77 = vld [vmem:[#allocation2 + $0xf8] sm:$0xff]
    %v78 = vld [vmem:[#allocation2 + $0x100] sm:$0xff]
    %v79 = vld [vmem:[#allocation2 + $0x108] sm:$0xff]
    %v80 = vld [vmem:[#allocation2 + $0x110] sm:$0xff]
    %v81 = vld [vmem:[#allocation2 + $0x118] sm:$0xff]
    %v82 = vld [vmem:[#allocation2 + $0x120] sm:$0xff]
    %v83 = vld [vmem:[#allocation2 + $0x128] sm:$0xff]
    %v84 = vld [vmem:[#allocation2 + $0x130] sm:$0xff]
    %v85 = vld [vmem:[#allocation2 + $0x138] sm:$0xff]
    %v86 = vld [vmem:[#allocation2 + $0x140] sm:$0xff]
    %v87 = vld [vmem:[#allocation2 + $0x148] sm:$0xff]
    %v88 = vld [vmem:[#allocation2 + $0x150] sm:$0xff]
    %v89 = vld [vmem:[#allocation2 + $0x158] sm:$0xff]
    %v90 = vld [vmem:[#allocation2 + $0x160] sm:$0xff]
    %v91 = vld [vmem:[#allocation2 + $0x168] sm:$0xff]
    %v92 = vld [vmem:[#allocation2 + $0x170] sm:$0xff]
    %v93 = vld [vmem:[#allocation2 + $0x178] sm:$0xff]
    %v94 = vld [vmem:[#allocation2 + $0x180] sm:$0xff]
    %v95 = vld [vmem:[#allocation2 + $0x188] sm:$0xff]
    %v96 = vld [vmem:[#allocation2 + $0x190] sm:$0xff]
    %v97 = vld [vmem:[#allocation2 + $0x198] sm:$0xff]
    %v98 = vld [vmem:[#allocation2 + $0x1a0] sm:$0xff]
    %v99 = vld [vmem:[#allocation2 + $0x1a8] sm:$0xff]
    %v100 = vld [vmem:[#allocation2 + $0x1b0] sm:$0xff]
    %v101 = vld [vmem:[#allocation2 + $0x1b8] sm:$0xff]
    %v102 = vld [vmem:[#allocation2 + $0x1c0] sm:$0xff]
    %v103 = vld [vmem:[#allocation2 + $0x1c8] sm:$0xff]
    %v104 = vld [vmem:[#allocation2 + $0x1d0] sm:$0xff]
    %v105 = vld [vmem:[#allocation2 + $0x1d8] sm:$0xff]
    %v106 = vld [vmem:[#allocation2 + $0x1e0] sm:$0xff]
    %v107 = vld [vmem:[#allocation2 + $0x1e8] sm:$0xff]
    %v108 = vld [vmem:[#allocation2 + $0x1f0] sm:$0xff]
    %v109 = vld [vmem:[#allocation2 + $0x1f8] sm:$0xff]
    %v110 = vld [vmem:[%s3] sm:$0xf]
    %v112 = vlaneseq
    %v113 = vshrl.u32 %v112, 7
    %v114 = vsub.s32 0, %v113
    %v115 = vrot.slane %v110, %v114
    %v116 = vlaneseq
    %v117 = vshrl.u32 %v116, 7
    %v118 = vsub.s32 1, %v117
    %v119 = vrot.slane %v110, %v118
    %v120 = vlaneseq
    %v121 = vshrl.u32 %v120, 7
    %v122 = vsub.s32 2, %v121
    %v123 = vrot.slane %v110, %v122
    %v124 = vlaneseq
    %v125 = vshrl.u32 %v124, 7
    %v126 = vsub.s32 3, %v125
    %v127 = vrot.slane %v110, %v126
    %v134 = vcombine.high %v44, %v44
    %v135 = vcombine.high %v45, %v45
    %vm136 = vcmask 31744
    %v138 = vsel %vm136, %v42, 0
    %v141 = vsel %vm136, %v43, 0
    %vm143 = vcmask 1043456
    %v144 = vsel %vm143, %v44, 0
    %v146 = vsel %vm143, %v134, 0
    %v148 = vsel %vm143, %v45, 0
    %v150 = vsel %vm143, %v135, 0
    %152 = vmatprep.subr.mxu0 0.0
    %153 = vmatpush1.msra.mxu0 0.0
    %154 = vmatprep.subr.mxu0 0.0
    %155 = vmatpush1.msra.mxu0 0.0
    %156 = vmatprep.subr.mxu0 0.0
    %157 = vmatpush1.msra.mxu0 0.0
    %158 = vmatprep.subr.mxu0 0.0
    %159 = vmatpush1.msra.mxu0 0.0
    %160 = vmatprep.subr.mxu0 0.0
    %161 = vmatpush1.msra.mxu0 0.0
    %162 = vmatprep.subr.mxu0 0.0
    %163 = vmatpush1.msra.mxu0 0.0
    %164 = vmatprep.subr.mxu0 0.0
    %165 = vmatpush1.msra.mxu0 0.0
    %166 = vmatprep.subr.mxu0 0.0
    %167 = vmatpush1.msra.mxu0 0.0
    %168 = vmatprep.subr.mxu0 0.0
    %169 = vmatpush1.msra.mxu0 0.0
    %170 = vmatprep.subr.mxu0 0.0
    %171 = vmatpush1.msra.mxu0 0.0
    %172 = vmatprep.subr.mxu0 0.0
    %173 = vmatpush1.msra.mxu0 0.0
    %174 = vmatprep.subr.mxu0 0.0
    %175 = vmatpush1.msra.mxu0 0.0
    %176 = vmatprep.subr.mxu0 0.0
    %177 = vmatpush1.msra.mxu0 0.0
    %178 = vmatprep.subr.mxu0 0.0
    %179 = vmatpush1.msra.mxu0 0.0
    %180 = vmatprep.subr.mxu0 0.0
    %181 = vmatpush1.msra.mxu0 0.0
    %182 = vmatprep.subr.mxu0 %v146
    %183 = vmatpush1.msra.mxu0 %v144
    %184 = vmatprep.subr.mxu0 0.0
    %185 = vmatpush2.msra.mxu0 0.0
    %186 = vmatprep.subr.mxu0 0.0
    %187 = vmatpush2.msra.mxu0 0.0
    %188 = vmatprep.subr.mxu0 0.0
    %189 = vmatpush2.msra.mxu0 0.0
    %190 = vmatprep.subr.mxu0 0.0
    %191 = vmatpush2.msra.mxu0 0.0
    %192 = vmatprep.subr.mxu0 0.0
    %193 = vmatpush2.msra.mxu0 0.0
    %194 = vmatprep.subr.mxu0 0.0
    %195 = vmatpush2.msra.mxu0 0.0
    %196 = vmatprep.subr.mxu0 0.0
    %197 = vmatpush2.msra.mxu0 0.0
    %198 = vmatprep.subr.mxu0 0.0
    %199 = vmatpush2.msra.mxu0 0.0
    %200 = vmatprep.subr.mxu0 0.0
    %201 = vmatpush2.msra.mxu0 0.0
    %202 = vmatprep.subr.mxu0 0.0
    %203 = vmatpush2.msra.mxu0 0.0
    %204 = vmatprep.subr.mxu0 0.0
    %205 = vmatpush2.msra.mxu0 0.0
    %206 = vmatprep.subr.mxu0 0.0
    %207 = vmatpush2.msra.mxu0 0.0
    %208 = vmatprep.subr.mxu0 0.0
    %209 = vmatpush2.msra.mxu0 0.0
    %210 = vmatprep.subr.mxu0 0.0
    %211 = vmatpush2.msra.mxu0 0.0
    %212 = vmatprep.subr.mxu0 0.0
    %213 = vmatpush2.msra.mxu0 0.0
    %214 = vmatprep.subr.mxu0 0.0
    %215 = vmatpush2.msra.mxu0 0.0
    %216 = vmatprep.mubr.f32.mxu0 0.0
    %217 = vmatmul.mubr.f32.gmra.mxu0 %v138
    %v218 = vpop.f32.mrf.mxu0
    %v219 = vadd.f32 %v115, %v218
    %v220 = vpop.f32.mrf.mxu0
    %v221 = vadd.f32 %v119, %v220
    %222 = vmatprep.mubr.f32.mxu0 0.0
    %223 = vmatmul.mubr.f32.gmra.mxu0 %v141
    %v224 = vpop.f32.mrf.mxu0
    %v225 = vadd.f32 %v115, %v224
    %v226 = vpop.f32.mrf.mxu0
    %v227 = vadd.f32 %v119, %v226
    %228 = vdwg.mxu0
    %229 = vmatprep.subr.mxu0 0.0
    %230 = vmatpush1.msra.mxu0 0.0
    %231 = vmatprep.subr.mxu0 0.0
    %232 = vmatpush1.msra.mxu0 0.0
    %233 = vmatprep.subr.mxu0 0.0
    %234 = vmatpush1.msra.mxu0 0.0
    %235 = vmatprep.subr.mxu0 0.0
    %236 = vmatpush1.msra.mxu0 0.0
    %237 = vmatprep.subr.mxu0 0.0
    %238 = vmatpush1.msra.mxu0 0.0
    %239 = vmatprep.subr.mxu0 0.0
    %240 = vmatpush1.msra.mxu0 0.0
    %241 = vmatprep.subr.mxu0 0.0
    %242 = vmatpush1.msra.mxu0 0.0
    %243 = vmatprep.subr.mxu0 0.0
    %244 = vmatpush1.msra.mxu0 0.0
    %245 = vmatprep.subr.mxu0 0.0
    %246 = vmatpush1.msra.mxu0 0.0
    %247 = vmatprep.subr.mxu0 0.0
    %248 = vmatpush1.msra.mxu0 0.0
    %249 = vmatprep.subr.mxu0 0.0
    %250 = vmatpush1.msra.mxu0 0.0
    %251 = vmatprep.subr.mxu0 0.0
    %252 = vmatpush1.msra.mxu0 0.0
    %253 = vmatprep.subr.mxu0 0.0
    %254 = vmatpush1.msra.mxu0 0.0
    %255 = vmatprep.subr.mxu0 0.0
    %256 = vmatpush1.msra.mxu0 0.0
    %257 = vmatprep.subr.mxu0 0.0
    %258 = vmatpush1.msra.mxu0 0.0
    %259 = vmatprep.subr.mxu0 %v150
    %260 = vmatpush1.msra.mxu0 %v148
    %261 = vmatprep.subr.mxu0 0.0
    %262 = vmatpush2.msra.mxu0 0.0
    %263 = vmatprep.subr.mxu0 0.0
    %264 = vmatpush2.msra.mxu0 0.0
    %265 = vmatprep.subr.mxu0 0.0
    %266 = vmatpush2.msra.mxu0 0.0
    %267 = vmatprep.subr.mxu0 0.0
    %268 = vmatpush2.msra.mxu0 0.0
    %269 = vmatprep.subr.mxu0 0.0
    %270 = vmatpush2.msra.mxu0 0.0
    %271 = vmatprep.subr.mxu0 0.0
    %272 = vmatpush2.msra.mxu0 0.0
    %273 = vmatprep.subr.mxu0 0.0
    %274 = vmatpush2.msra.mxu0 0.0
    %275 = vmatprep.subr.mxu0 0.0
    %276 = vmatpush2.msra.mxu0 0.0
    %277 = vmatprep.subr.mxu0 0.0
    %278 = vmatpush2.msra.mxu0 0.0
    %279 = vmatprep.subr.mxu0 0.0
    %280 = vmatpush2.msra.mxu0 0.0
    %281 = vmatprep.subr.mxu0 0.0
    %282 = vmatpush2.msra.mxu0 0.0
    %283 = vmatprep.subr.mxu0 0.0
    %284 = vmatpush2.msra.mxu0 0.0
    %285 = vmatprep.subr.mxu0 0.0
    %286 = vmatpush2.msra.mxu0 0.0
    %287 = vmatprep.subr.mxu0 0.0
    %288 = vmatpush2.msra.mxu0 0.0
    %289 = vmatprep.subr.mxu0 0.0
    %290 = vmatpush2.msra.mxu0 0.0
    %291 = vmatprep.subr.mxu0 0.0
    %292 = vmatpush2.msra.mxu0 0.0
    %293 = vmatprep.mubr.f32.mxu0 0.0
    %294 = vmatmul.mubr.f32.gmra.mxu0 %v138
    %v295 = vpop.f32.mrf.mxu0
    %v296 = vadd.f32 %v123, %v295
    %v297 = vpop.f32.mrf.mxu0
    %v298 = vadd.f32 %v127, %v297
    %299 = vmatprep.mubr.f32.mxu0 0.0
    %300 = vmatmul.mubr.f32.gmra.mxu0 %v141
    %v301 = vpop.f32.mrf.mxu0
    %v302 = vadd.f32 %v123, %v301
    %v303 = vpop.f32.mrf.mxu0
    %v304 = vadd.f32 %v127, %v303
    %305 = vdwg.mxu0
    %306 = vmatprep.subr.mxu0 %v107
    %307 = vmatpush1.msra.mxu0 %v106
    %308 = vmatprep.subr.mxu0 %v103
    %309 = vmatpush1.msra.mxu0 %v102
    %310 = vmatprep.subr.mxu0 %v99
    %311 = vmatpush1.msra.mxu0 %v98
    %312 = vmatprep.subr.mxu0 %v95
    %313 = vmatpush1.msra.mxu0 %v94
    %314 = vmatprep.subr.mxu0 %v91
    %315 = vmatpush1.msra.mxu0 %v90
    %316 = vmatprep.subr.mxu0 %v87
    %317 = vmatpush1.msra.mxu0 %v86
    %318 = vmatprep.subr.mxu0 %v83
    %319 = vmatpush1.msra.mxu0 %v82
    %320 = vmatprep.subr.mxu0 %v79
    %321 = vmatpush1.msra.mxu0 %v78
    %322 = vmatprep.subr.mxu0 %v75
    %323 = vmatpush1.msra.mxu0 %v74
    %324 = vmatprep.subr.mxu0 %v71
    %325 = vmatpush1.msra.mxu0 %v70
    %326 = vmatprep.subr.mxu0 %v67
    %327 = vmatpush1.msra.mxu0 %v66
    %328 = vmatprep.subr.mxu0 %v63
    %329 = vmatpush1.msra.mxu0 %v62
    %330 = vmatprep.subr.mxu0 %v59
    %331 = vmatpush1.msra.mxu0 %v58
    %332 = vmatprep.subr.mxu0 %v55
    %333 = vmatpush1.msra.mxu0 %v54
    %334 = vmatprep.subr.mxu0 %v51
    %335 = vmatpush1.msra.mxu0 %v50
    %336 = vmatprep.subr.mxu0 %v47
    %337 = vmatpush1.msra.mxu0 %v46
    %338 = vmatprep.subr.mxu0 0.0
    %339 = vmatpush2.msra.mxu0 0.0
    %340 = vmatprep.subr.mxu0 0.0
    %341 = vmatpush2.msra.mxu0 0.0
    %342 = vmatprep.subr.mxu0 0.0
    %343 = vmatpush2.msra.mxu0 0.0
    %344 = vmatprep.subr.mxu0 0.0
    %345 = vmatpush2.msra.mxu0 0.0
    %346 = vmatprep.subr.mxu0 0.0
    %347 = vmatpush2.msra.mxu0 0.0
    %348 = vmatprep.subr.mxu0 0.0
    %349 = vmatpush2.msra.mxu0 0.0
    %350 = vmatprep.subr.mxu0 0.0
    %351 = vmatpush2.msra.mxu0 0.0
    %352 = vmatprep.subr.mxu0 0.0
    %353 = vmatpush2.msra.mxu0 0.0
    %354 = vmatprep.subr.mxu0 0.0
    %355 = vmatpush2.msra.mxu0 0.0
    %356 = vmatprep.subr.mxu0 0.0
    %357 = vmatpush2.msra.mxu0 0.0
    %358 = vmatprep.subr.mxu0 0.0
    %359 = vmatpush2.msra.mxu0 0.0
    %360 = vmatprep.subr.mxu0 0.0
    %361 = vmatpush2.msra.mxu0 0.0
    %362 = vmatprep.subr.mxu0 0.0
    %363 = vmatpush2.msra.mxu0 0.0
    %364 = vmatprep.subr.mxu0 0.0
    %365 = vmatpush2.msra.mxu0 0.0
    %366 = vmatprep.subr.mxu0 0.0
    %367 = vmatpush2.msra.mxu0 0.0
    %368 = vmatprep.subr.mxu0 0.0
    %369 = vmatpush2.msra.mxu0 0.0
    %370 = vmatprep.mubr.f32.mxu0 0.0
    %371 = vmatmul.mubr.f32.gmra.mxu0 0.0
    %v372 = vpop.f32.mrf.mxu0
    %v373 = vadd.f32 0.0, %v372
    %v374 = vpop.f32.mrf.mxu0
    %v375 = vadd.f32 0.0, %v374
    %376 = vdwg.mxu0
    %377 = vmatprep.subr.mxu0 %v109
    %378 = vmatpush1.msra.mxu0 %v108
    %379 = vmatprep.subr.mxu0 %v105
    %380 = vmatpush1.msra.mxu0 %v104
    %381 = vmatprep.subr.mxu0 %v101
    %382 = vmatpush1.msra.mxu0 %v100
    %383 = vmatprep.subr.mxu0 %v97
    %384 = vmatpush1.msra.mxu0 %v96
    %385 = vmatprep.subr.mxu0 %v93
    %386 = vmatpush1.msra.mxu0 %v92
    %387 = vmatprep.subr.mxu0 %v89
    %388 = vmatpush1.msra.mxu0 %v88
    %389 = vmatprep.subr.mxu0 %v85
    %390 = vmatpush1.msra.mxu0 %v84
    %391 = vmatprep.subr.mxu0 %v81
    %392 = vmatpush1.msra.mxu0 %v80
    %393 = vmatprep.subr.mxu0 %v77
    %394 = vmatpush1.msra.mxu0 %v76
    %395 = vmatprep.subr.mxu0 %v73
    %396 = vmatpush1.msra.mxu0 %v72
    %397 = vmatprep.subr.mxu0 %v69
    %398 = vmatpush1.msra.mxu0 %v68
    %399 = vmatprep.subr.mxu0 %v65
    %400 = vmatpush1.msra.mxu0 %v64
    %401 = vmatprep.subr.mxu0 %v61
    %402 = vmatpush1.msra.mxu0 %v60
    %403 = vmatprep.subr.mxu0 %v57
    %404 = vmatpush1.msra.mxu0 %v56
    %405 = vmatprep.subr.mxu0 %v53
    %406 = vmatpush1.msra.mxu0 %v52
    %407 = vmatprep.subr.mxu0 %v49
    %408 = vmatpush1.msra.mxu0 %v48
    %409 = vmatprep.subr.mxu0 0.0
    %410 = vmatpush2.msra.mxu0 0.0
    %411 = vmatprep.subr.mxu0 0.0
    %412 = vmatpush2.msra.mxu0 0.0
    %413 = vmatprep.subr.mxu0 0.0
    %414 = vmatpush2.msra.mxu0 0.0
    %415 = vmatprep.subr.mxu0 0.0
    %416 = vmatpush2.msra.mxu0 0.0
    %417 = vmatprep.subr.mxu0 0.0
    %418 = vmatpush2.msra.mxu0 0.0
    %419 = vmatprep.subr.mxu0 0.0
    %420 = vmatpush2.msra.mxu0 0.0
    %421 = vmatprep.subr.mxu0 0.0
    %422 = vmatpush2.msra.mxu0 0.0
    %423 = vmatprep.subr.mxu0 0.0
    %424 = vmatpush2.msra.mxu0 0.0
    %425 = vmatprep.subr.mxu0 0.0
    %426 = vmatpush2.msra.mxu0 0.0
    %427 = vmatprep.subr.mxu0 0.0
    %428 = vmatpush2.msra.mxu0 0.0
    %429 = vmatprep.subr.mxu0 0.0
    %430 = vmatpush2.msra.mxu0 0.0
    %431 = vmatprep.subr.mxu0 0.0
    %432 = vmatpush2.msra.mxu0 0.0
    %433 = vmatprep.subr.mxu0 0.0
    %434 = vmatpush2.msra.mxu0 0.0
    %435 = vmatprep.subr.mxu0 0.0
    %436 = vmatpush2.msra.mxu0 0.0
    %437 = vmatprep.subr.mxu0 0.0
    %438 = vmatpush2.msra.mxu0 0.0
    %439 = vmatprep.subr.mxu0 0.0
    %440 = vmatpush2.msra.mxu0 0.0
    %441 = vmatprep.mubr.f32.mxu0 0.0
    %442 = vmatmul.mubr.f32.gmra.mxu0 0.0
    %v443 = vpop.f32.mrf.mxu0
    %v444 = vadd.f32 0.0, %v443
    %v445 = vpop.f32.mrf.mxu0
    %v446 = vadd.f32 0.0, %v445
    %447 = vdwg.mxu0
    %v452 = vrot.slane %v373, 1
    %v453 = vrot.slane %v375, 1
    %v454 = vrot.slane %v444, 1
    %v455 = vrot.slane %v446, 1
    %v464 = vadd.f32 %v219, %v373
    %v465 = vadd.f32 %v221, %v375
    %v466 = vadd.f32 %v296, %v444
    %v467 = vadd.f32 %v298, %v446
    %v468 = vadd.f32 %v225, %v452
    %v469 = vadd.f32 %v227, %v453
    %v470 = vadd.f32 %v302, %v454
    %v471 = vadd.f32 %v304, %v455
    %v472 = vxor.u32 %v464, 2147483648
    %v473 = vxor.u32 %v468, 2147483648
    %v474 = vmul.f32 %v472, 1.442695
    %v475 = vpow.pop %v474
    %v476 = vmul.f32 %v473, 1.442695
    %v477 = vpow.pop %v476
    %v478 = vadd.f32 %v475, 1.0
    %v479 = vadd.f32 %v477, 1.0
    %v480 = vrcp.pop %v478
    %v481 = vmul.f32 1.0, %v480
    %v482 = vrcp.pop %v479
    %v483 = vmul.f32 1.0, %v482
    %v484 = vxor.u32 %v465, 2147483648
    %v485 = vxor.u32 %v469, 2147483648
    %v486 = vmul.f32 %v484, 1.442695
    %v487 = vpow.pop %v486
    %v488 = vmul.f32 %v485, 1.442695
    %v489 = vpow.pop %v488
    %v490 = vadd.f32 %v487, 1.0
    %v491 = vadd.f32 %v489, 1.0
    %v492 = vrcp.pop %v490
    %v493 = vmul.f32 1.0, %v492
    %v494 = vrcp.pop %v491
    %v495 = vmul.f32 1.0, %v494
    %v496 = vtanh.pop %v466
    %v497 = vtanh.pop %v470
    %v498 = vxor.u32 %v467, 2147483648
    %v499 = vxor.u32 %v471, 2147483648
    %v500 = vmul.f32 %v498, 1.442695
    %v501 = vpow.pop %v500
    %v502 = vmul.f32 %v499, 1.442695
    %v503 = vpow.pop %v502
    %v504 = vadd.f32 %v501, 1.0
    %v505 = vadd.f32 %v503, 1.0
    %v506 = vrcp.pop %v504
    %v507 = vmul.f32 1.0, %v506
    %v508 = vrcp.pop %v505
    %v509 = vmul.f32 1.0, %v508
    %v510 = vmul.f32 %v493, 0.0
    %v511 = vmul.f32 %v495, 0.0
    %v512 = vmul.f32 %v481, %v496
    %v513 = vmul.f32 %v483, %v497
    %v514 = vadd.f32 %v510, %v512
    %v515 = vadd.f32 %v511, %v513
    %v516 = vtanh.pop %v514
    %v517 = vtanh.pop %v515
    %v518 = vmul.f32 %v507, %v516
    %v519 = vmul.f32 %v509, %v517
    %v522 = vrot.slane %v519, 7
    %vm523 = vcmask 1041409
    %v524 = vsel %vm523, %v522, %v518
    %526 = vmatprep.subr.mxu0 %v107
    %527 = vmatpush1.msra.mxu0 %v106
    %528 = vmatprep.subr.mxu0 %v103
    %529 = vmatpush1.msra.mxu0 %v102
    %530 = vmatprep.subr.mxu0 %v99
    %531 = vmatpush1.msra.mxu0 %v98
    %532 = vmatprep.subr.mxu0 %v95
    %533 = vmatpush1.msra.mxu0 %v94
    %534 = vmatprep.subr.mxu0 %v91
    %535 = vmatpush1.msra.mxu0 %v90
    %536 = vmatprep.subr.mxu0 %v87
    %537 = vmatpush1.msra.mxu0 %v86
    %538 = vmatprep.subr.mxu0 %v83
    %539 = vmatpush1.msra.mxu0 %v82
    %540 = vmatprep.subr.mxu0 %v79
    %541 = vmatpush1.msra.mxu0 %v78
    %542 = vmatprep.subr.mxu0 %v75
    %543 = vmatpush1.msra.mxu0 %v74
    %544 = vmatprep.subr.mxu0 %v71
    %545 = vmatpush1.msra.mxu0 %v70
    %546 = vmatprep.subr.mxu0 %v67
    %547 = vmatpush1.msra.mxu0 %v66
    %548 = vmatprep.subr.mxu0 %v63
    %549 = vmatpush1.msra.mxu0 %v62
    %550 = vmatprep.subr.mxu0 %v59
    %551 = vmatpush1.msra.mxu0 %v58
    %552 = vmatprep.subr.mxu0 %v55
    %553 = vmatpush1.msra.mxu0 %v54
    %554 = vmatprep.subr.mxu0 %v51
    %555 = vmatpush1.msra.mxu0 %v50
    %556 = vmatprep.subr.mxu0 %v47
    %557 = vmatpush1.msra.mxu0 %v46
    %558 = vmatprep.subr.mxu0 0.0
    %559 = vmatpush2.msra.mxu0 0.0
    %560 = vmatprep.subr.mxu0 0.0
    %561 = vmatpush2.msra.mxu0 0.0
    %562 = vmatprep.subr.mxu0 0.0
    %563 = vmatpush2.msra.mxu0 0.0
    %564 = vmatprep.subr.mxu0 0.0
    %565 = vmatpush2.msra.mxu0 0.0
    %566 = vmatprep.subr.mxu0 0.0
    %567 = vmatpush2.msra.mxu0 0.0
    %568 = vmatprep.subr.mxu0 0.0
    %569 = vmatpush2.msra.mxu0 0.0
    %570 = vmatprep.subr.mxu0 0.0
    %571 = vmatpush2.msra.mxu0 0.0
    %572 = vmatprep.subr.mxu0 0.0
    %573 = vmatpush2.msra.mxu0 0.0
    %574 = vmatprep.subr.mxu0 0.0
    %575 = vmatpush2.msra.mxu0 0.0
    %576 = vmatprep.subr.mxu0 0.0
    %577 = vmatpush2.msra.mxu0 0.0
    %578 = vmatprep.subr.mxu0 0.0
    %579 = vmatpush2.msra.mxu0 0.0
    %580 = vmatprep.subr.mxu0 0.0
    %581 = vmatpush2.msra.mxu0 0.0
    %582 = vmatprep.subr.mxu0 0.0
    %583 = vmatpush2.msra.mxu0 0.0
    %584 = vmatprep.subr.mxu0 0.0
    %585 = vmatpush2.msra.mxu0 0.0
    %586 = vmatprep.subr.mxu0 0.0
    %587 = vmatpush2.msra.mxu0 0.0
    %588 = vmatprep.subr.mxu0 0.0
    %589 = vmatpush2.msra.mxu0 0.0
    %590 = vmatprep.mubr.f32.mxu0 0.0
    %591 = vmatmul.mubr.f32.gmra.mxu0 %v524
    %v592 = vpop.f32.mrf.mxu0
    %v593 = vadd.f32 0.0, %v592
    %v594 = vpop.f32.mrf.mxu0
    %v595 = vadd.f32 0.0, %v594
    %596 = vdwg.mxu0
    %597 = vmatprep.subr.mxu0 %v109
    %598 = vmatpush1.msra.mxu0 %v108
    %599 = vmatprep.subr.mxu0 %v105
    %600 = vmatpush1.msra.mxu0 %v104
    %601 = vmatprep.subr.mxu0 %v101
    %602 = vmatpush1.msra.mxu0 %v100
    %603 = vmatprep.subr.mxu0 %v97
    %604 = vmatpush1.msra.mxu0 %v96
    %605 = vmatprep.subr.mxu0 %v93
    %606 = vmatpush1.msra.mxu0 %v92
    %607 = vmatprep.subr.mxu0 %v89
    %608 = vmatpush1.msra.mxu0 %v88
    %609 = vmatprep.subr.mxu0 %v85
    %610 = vmatpush1.msra.mxu0 %v84
    %611 = vmatprep.subr.mxu0 %v81
    %612 = vmatpush1.msra.mxu0 %v80
    %613 = vmatprep.subr.mxu0 %v77
    %614 = vmatpush1.msra.mxu0 %v76
    %615 = vmatprep.subr.mxu0 %v73
    %616 = vmatpush1.msra.mxu0 %v72
    %617 = vmatprep.subr.mxu0 %v69
    %618 = vmatpush1.msra.mxu0 %v68
    %619 = vmatprep.subr.mxu0 %v65
    %620 = vmatpush1.msra.mxu0 %v64
    %621 = vmatprep.subr.mxu0 %v61
    %622 = vmatpush1.msra.mxu0 %v60
    %623 = vmatprep.subr.mxu0 %v57
    %624 = vmatpush1.msra.mxu0 %v56
    %625 = vmatprep.subr.mxu0 %v53
    %626 = vmatpush1.msra.mxu0 %v52
    %627 = vmatprep.subr.mxu0 %v49
    %628 = vmatpush1.msra.mxu0 %v48
    %629 = vmatprep.subr.mxu0 0.0
    %630 = vmatpush2.msra.mxu0 0.0
    %631 = vmatprep.subr.mxu0 0.0
    %632 = vmatpush2.msra.mxu0 0.0
    %633 = vmatprep.subr.mxu0 0.0
    %634 = vmatpush2.msra.mxu0 0.0
    %635 = vmatprep.subr.mxu0 0.0
    %636 = vmatpush2.msra.mxu0 0.0
    %637 = vmatprep.subr.mxu0 0.0
    %638 = vmatpush2.msra.mxu0 0.0
    %639 = vmatprep.subr.mxu0 0.0
    %640 = vmatpush2.msra.mxu0 0.0
    %641 = vmatprep.subr.mxu0 0.0
    %642 = vmatpush2.msra.mxu0 0.0
    %643 = vmatprep.subr.mxu0 0.0
    %644 = vmatpush2.msra.mxu0 0.0
    %645 = vmatprep.subr.mxu0 0.0
    %646 = vmatpush2.msra.mxu0 0.0
    %647 = vmatprep.subr.mxu0 0.0
    %648 = vmatpush2.msra.mxu0 0.0
    %649 = vmatprep.subr.mxu0 0.0
    %650 = vmatpush2.msra.mxu0 0.0
    %651 = vmatprep.subr.mxu0 0.0
    %652 = vmatpush2.msra.mxu0 0.0
    %653 = vmatprep.subr.mxu0 0.0
    %654 = vmatpush2.msra.mxu0 0.0
    %655 = vmatprep.subr.mxu0 0.0
    %656 = vmatpush2.msra.mxu0 0.0
    %657 = vmatprep.subr.mxu0 0.0
    %658 = vmatpush2.msra.mxu0 0.0
    %659 = vmatprep.subr.mxu0 0.0
    %660 = vmatpush2.msra.mxu0 0.0
    %661 = vmatprep.mubr.f32.mxu0 0.0
    %662 = vmatmul.mubr.f32.gmra.mxu0 %v524
    %v663 = vpop.f32.mrf.mxu0
    %v664 = vadd.f32 0.0, %v663
    %v665 = vpop.f32.mrf.mxu0
    %v666 = vadd.f32 0.0, %v665
    %667 = vdwg.mxu0
    %v672 = vrot.slane %v593, 7
    %v673 = vrot.slane %v595, 7
    %v674 = vrot.slane %v664, 7
    %v675 = vrot.slane %v666, 7
    %v684 = vadd.f32 %v219, %v672
    %v685 = vadd.f32 %v221, %v673
    %v686 = vadd.f32 %v296, %v674
    %v687 = vadd.f32 %v298, %v675
    %v688 = vadd.f32 %v225, %v593
    %v689 = vadd.f32 %v227, %v595
    %v690 = vadd.f32 %v302, %v664
    %v691 = vadd.f32 %v304, %v666
    %v692 = vxor.u32 %v684, 2147483648
    %v693 = vxor.u32 %v688, 2147483648
    %v694 = vmul.f32 %v692, 1.442695
    %v695 = vpow.pop %v694
    %v696 = vmul.f32 %v693, 1.442695
    %v697 = vpow.pop %v696
    %v698 = vadd.f32 %v695, 1.0
    %v699 = vadd.f32 %v697, 1.0
    %v700 = vrcp.pop %v698
    %v701 = vmul.f32 1.0, %v700
    %v702 = vrcp.pop %v699
    %v703 = vmul.f32 1.0, %v702
    %v704 = vxor.u32 %v685, 2147483648
    %v705 = vxor.u32 %v689, 2147483648
    %v706 = vmul.f32 %v704, 1.442695
    %v707 = vpow.pop %v706
    %v708 = vmul.f32 %v705, 1.442695
    %v709 = vpow.pop %v708
    %v710 = vadd.f32 %v707, 1.0
    %v711 = vadd.f32 %v709, 1.0
    %v712 = vrcp.pop %v710
    %v713 = vmul.f32 1.0, %v712
    %v714 = vrcp.pop %v711
    %v715 = vmul.f32 1.0, %v714
    %v716 = vtanh.pop %v686
    %v717 = vtanh.pop %v690
    %v718 = vxor.u32 %v687, 2147483648
    %v719 = vxor.u32 %v691, 2147483648
    %v720 = vmul.f32 %v718, 1.442695
    %v721 = vpow.pop %v720
    %v722 = vmul.f32 %v719, 1.442695
    %v723 = vpow.pop %v722
    %v724 = vadd.f32 %v721, 1.0
    %v725 = vadd.f32 %v723, 1.0
    %v726 = vrcp.pop %v724
    %v727 = vmul.f32 1.0, %v726
    %v728 = vrcp.pop %v725
    %v729 = vmul.f32 1.0, %v728
    %v732 = vrot.slane %v514, 7
    %v733 = vrot.slane %v515, 7
    %v736 = vmul.f32 %v713, %v732
    %v737 = vmul.f32 %v715, %v733
    %v738 = vmul.f32 %v701, %v716
    %v739 = vmul.f32 %v703, %v717
    %v740 = vadd.f32 %v736, %v738
    %v741 = vadd.f32 %v737, %v739
    %v742 = vtanh.pop %v740
    %v743 = vtanh.pop %v741
    %v744 = vmul.f32 %v727, %v742
    %v745 = vmul.f32 %v729, %v743
    %v748 = vrot.slane %v744, 1
    %v749 = vsel %vm523, %v745, %v748
    %751 = vmatprep.subr.mxu0 %v107
    %752 = vmatpush1.msra.mxu0 %v106
    %753 = vmatprep.subr.mxu0 %v103
    %754 = vmatpush1.msra.mxu0 %v102
    %755 = vmatprep.subr.mxu0 %v99
    %756 = vmatpush1.msra.mxu0 %v98
    %757 = vmatprep.subr.mxu0 %v95
    %758 = vmatpush1.msra.mxu0 %v94
    %759 = vmatprep.subr.mxu0 %v91
    %760 = vmatpush1.msra.mxu0 %v90
    %761 = vmatprep.subr.mxu0 %v87
    %762 = vmatpush1.msra.mxu0 %v86
    %763 = vmatprep.subr.mxu0 %v83
    %764 = vmatpush1.msra.mxu0 %v82
    %765 = vmatprep.subr.mxu0 %v79
    %766 = vmatpush1.msra.mxu0 %v78
    %767 = vmatprep.subr.mxu0 %v75
    %768 = vmatpush1.msra.mxu0 %v74
    %769 = vmatprep.subr.mxu0 %v71
    %770 = vmatpush1.msra.mxu0 %v70
    %771 = vmatprep.subr.mxu0 %v67
    %772 = vmatpush1.msra.mxu0 %v66
    %773 = vmatprep.subr.mxu0 %v63
    %774 = vmatpush1.msra.mxu0 %v62
    %775 = vmatprep.subr.mxu0 %v59
    %776 = vmatpush1.msra.mxu0 %v58
    %777 = vmatprep.subr.mxu0 %v55
    %778 = vmatpush1.msra.mxu0 %v54
    %779 = vmatprep.subr.mxu0 %v51
    %780 = vmatpush1.msra.mxu0 %v50
    %781 = vmatprep.subr.mxu0 %v47
    %782 = vmatpush1.msra.mxu0 %v46
    %783 = vmatprep.subr.mxu0 0.0
    %784 = vmatpush2.msra.mxu0 0.0
    %785 = vmatprep.subr.mxu0 0.0
    %786 = vmatpush2.msra.mxu0 0.0
    %787 = vmatprep.subr.mxu0 0.0
    %788 = vmatpush2.msra.mxu0 0.0
    %789 = vmatprep.subr.mxu0 0.0
    %790 = vmatpush2.msra.mxu0 0.0
    %791 = vmatprep.subr.mxu0 0.0
    %792 = vmatpush2.msra.mxu0 0.0
    %793 = vmatprep.subr.mxu0 0.0
    %794 = vmatpush2.msra.mxu0 0.0
    %795 = vmatprep.subr.mxu0 0.0
    %796 = vmatpush2.msra.mxu0 0.0
    %797 = vmatprep.subr.mxu0 0.0
    %798 = vmatpush2.msra.mxu0 0.0
    %799 = vmatprep.subr.mxu0 0.0
    %800 = vmatpush2.msra.mxu0 0.0
    %801 = vmatprep.subr.mxu0 0.0
    %802 = vmatpush2.msra.mxu0 0.0
    %803 = vmatprep.subr.mxu0 0.0
    %804 = vmatpush2.msra.mxu0 0.0
    %805 = vmatprep.subr.mxu0 0.0
    %806 = vmatpush2.msra.mxu0 0.0
    %807 = vmatprep.subr.mxu0 0.0
    %808 = vmatpush2.msra.mxu0 0.0
    %809 = vmatprep.subr.mxu0 0.0
    %810 = vmatpush2.msra.mxu0 0.0
    %811 = vmatprep.subr.mxu0 0.0
    %812 = vmatpush2.msra.mxu0 0.0
    %813 = vmatprep.subr.mxu0 0.0
    %814 = vmatpush2.msra.mxu0 0.0
    %815 = vmatprep.mubr.f32.mxu0 0.0
    %816 = vmatmul.mubr.f32.gmra.mxu0 %v749
    %v817 = vpop.f32.mrf.mxu0
    %v818 = vadd.f32 0.0, %v817
    %v819 = vpop.f32.mrf.mxu0
    %v820 = vadd.f32 0.0, %v819
    %821 = vdwg.mxu0
    %822 = vmatprep.subr.mxu0 %v109
    %823 = vmatpush1.msra.mxu0 %v108
    %824 = vmatprep.subr.mxu0 %v105
    %825 = vmatpush1.msra.mxu0 %v104
    %826 = vmatprep.subr.mxu0 %v101
    %827 = vmatpush1.msra.mxu0 %v100
    %828 = vmatprep.subr.mxu0 %v97
    %829 = vmatpush1.msra.mxu0 %v96
    %830 = vmatprep.subr.mxu0 %v93
    %831 = vmatpush1.msra.mxu0 %v92
    %832 = vmatprep.subr.mxu0 %v89
    %833 = vmatpush1.msra.mxu0 %v88
    %834 = vmatprep.subr.mxu0 %v85
    %835 = vmatpush1.msra.mxu0 %v84
    %836 = vmatprep.subr.mxu0 %v81
    %837 = vmatpush1.msra.mxu0 %v80
    %838 = vmatprep.subr.mxu0 %v77
    %839 = vmatpush1.msra.mxu0 %v76
    %840 = vmatprep.subr.mxu0 %v73
    %841 = vmatpush1.msra.mxu0 %v72
    %842 = vmatprep.subr.mxu0 %v69
    %843 = vmatpush1.msra.mxu0 %v68
    %844 = vmatprep.subr.mxu0 %v65
    %845 = vmatpush1.msra.mxu0 %v64
    %846 = vmatprep.subr.mxu0 %v61
    %847 = vmatpush1.msra.mxu0 %v60
    %848 = vmatprep.subr.mxu0 %v57
    %849 = vmatpush1.msra.mxu0 %v56
    %850 = vmatprep.subr.mxu0 %v53
    %851 = vmatpush1.msra.mxu0 %v52
    %852 = vmatprep.subr.mxu0 %v49
    %853 = vmatpush1.msra.mxu0 %v48
    %854 = vmatprep.subr.mxu0 0.0
    %855 = vmatpush2.msra.mxu0 0.0
    %856 = vmatprep.subr.mxu0 0.0
    %857 = vmatpush2.msra.mxu0 0.0
    %858 = vmatprep.subr.mxu0 0.0
    %859 = vmatpush2.msra.mxu0 0.0
    %860 = vmatprep.subr.mxu0 0.0
    %861 = vmatpush2.msra.mxu0 0.0
    %862 = vmatprep.subr.mxu0 0.0
    %863 = vmatpush2.msra.mxu0 0.0
    %864 = vmatprep.subr.mxu0 0.0
    %865 = vmatpush2.msra.mxu0 0.0
    %866 = vmatprep.subr.mxu0 0.0
    %867 = vmatpush2.msra.mxu0 0.0
    %868 = vmatprep.subr.mxu0 0.0
    %869 = vmatpush2.msra.mxu0 0.0
    %870 = vmatprep.subr.mxu0 0.0
    %871 = vmatpush2.msra.mxu0 0.0
    %872 = vmatprep.subr.mxu0 0.0
    %873 = vmatpush2.msra.mxu0 0.0
    %874 = vmatprep.subr.mxu0 0.0
    %875 = vmatpush2.msra.mxu0 0.0
    %876 = vmatprep.subr.mxu0 0.0
    %877 = vmatpush2.msra.mxu0 0.0
    %878 = vmatprep.subr.mxu0 0.0
    %879 = vmatpush2.msra.mxu0 0.0
    %880 = vmatprep.subr.mxu0 0.0
    %881 = vmatpush2.msra.mxu0 0.0
    %882 = vmatprep.subr.mxu0 0.0
    %883 = vmatpush2.msra.mxu0 0.0
    %884 = vmatprep.subr.mxu0 0.0
    %885 = vmatpush2.msra.mxu0 0.0
    %886 = vmatprep.mubr.f32.mxu0 0.0
    %887 = vmatmul.mubr.f32.gmra.mxu0 %v749
    %v888 = vpop.f32.mrf.mxu0
    %v889 = vadd.f32 0.0, %v888
    %v890 = vpop.f32.mrf.mxu0
    %v891 = vadd.f32 0.0, %v890
    %892 = vdwg.mxu0
    %v897 = vrot.slane %v818, 6
    %v898 = vrot.slane %v820, 6
    %v899 = vrot.slane %v889, 6
    %v900 = vrot.slane %v891, 6
    %v901 = vrot.slane %v818, 7
    %v902 = vrot.slane %v820, 7
    %v903 = vrot.slane %v889, 7
    %v904 = vrot.slane %v891, 7
    %v913 = vadd.f32 %v219, %v897
    %v914 = vadd.f32 %v221, %v898
    %v915 = vadd.f32 %v296, %v899
    %v916 = vadd.f32 %v298, %v900
    %v917 = vadd.f32 %v225, %v901
    %v918 = vadd.f32 %v227, %v902
    %v919 = vadd.f32 %v302, %v903
    %v920 = vadd.f32 %v304, %v904
    %v921 = vxor.u32 %v913, 2147483648
    %v922 = vxor.u32 %v917, 2147483648
    %v923 = vmul.f32 %v921, 1.442695
    %v924 = vpow.pop %v923
    %v925 = vmul.f32 %v922, 1.442695
    %v926 = vpow.pop %v925
    %v927 = vadd.f32 %v924, 1.0
    %v928 = vadd.f32 %v926, 1.0
    %v929 = vrcp.pop %v927
    %v930 = vmul.f32 1.0, %v929
    %v931 = vrcp.pop %v928
    %v932 = vmul.f32 1.0, %v931
    %v933 = vxor.u32 %v914, 2147483648
    %v934 = vxor.u32 %v918, 2147483648
    %v935 = vmul.f32 %v933, 1.442695
    %v936 = vpow.pop %v935
    %v937 = vmul.f32 %v934, 1.442695
    %v938 = vpow.pop %v937
    %v939 = vadd.f32 %v936, 1.0
    %v940 = vadd.f32 %v938, 1.0
    %v941 = vrcp.pop %v939
    %v942 = vmul.f32 1.0, %v941
    %v943 = vrcp.pop %v940
    %v944 = vmul.f32 1.0, %v943
    %v945 = vtanh.pop %v915
    %v946 = vtanh.pop %v919
    %v947 = vxor.u32 %v916, 2147483648
    %v948 = vxor.u32 %v920, 2147483648
    %v949 = vmul.f32 %v947, 1.442695
    %v950 = vpow.pop %v949
    %v951 = vmul.f32 %v948, 1.442695
    %v952 = vpow.pop %v951
    %v953 = vadd.f32 %v950, 1.0
    %v954 = vadd.f32 %v952, 1.0
    %v955 = vrcp.pop %v953
    %v956 = vmul.f32 1.0, %v955
    %v957 = vrcp.pop %v954
    %v958 = vmul.f32 1.0, %v957
    %v961 = vrot.slane %v740, 7
    %v962 = vrot.slane %v741, 7
    %v965 = vmul.f32 %v942, %v961
    %v966 = vmul.f32 %v944, %v962
    %v967 = vmul.f32 %v930, %v945
    %v968 = vmul.f32 %v932, %v946
    %v969 = vadd.f32 %v965, %v967
    %v970 = vadd.f32 %v966, %v968
    %v971 = vtanh.pop %v969
    %v972 = vtanh.pop %v970
    %v973 = vmul.f32 %v956, %v971
    %v974 = vmul.f32 %v958, %v972
    %v977 = vrot.slane %v973, 2
    %v978 = vrot.slane %v974, 1
    %v979 = vsel %vm523, %v978, %v977
    %981 = vmatprep.subr.mxu0 %v107
    %982 = vmatpush1.msra.mxu0 %v106
    %983 = vmatprep.subr.mxu0 %v103
    %984 = vmatpush1.msra.mxu0 %v102
    %985 = vmatprep.subr.mxu0 %v99
    %986 = vmatpush1.msra.mxu0 %v98
    %987 = vmatprep.subr.mxu0 %v95
    %988 = vmatpush1.msra.mxu0 %v94
    %989 = vmatprep.subr.mxu0 %v91
    %990 = vmatpush1.msra.mxu0 %v90
    %991 = vmatprep.subr.mxu0 %v87
    %992 = vmatpush1.msra.mxu0 %v86
    %993 = vmatprep.subr.mxu0 %v83
    %994 = vmatpush1.msra.mxu0 %v82
    %995 = vmatprep.subr.mxu0 %v79
    %996 = vmatpush1.msra.mxu0 %v78
    %997 = vmatprep.subr.mxu0 %v75
    %998 = vmatpush1.msra.mxu0 %v74
    %999 = vmatprep.subr.mxu0 %v71
    %1000 = vmatpush1.msra.mxu0 %v70
    %1001 = vmatprep.subr.mxu0 %v67
    %1002 = vmatpush1.msra.mxu0 %v66
    %1003 = vmatprep.subr.mxu0 %v63
    %1004 = vmatpush1.msra.mxu0 %v62
    %1005 = vmatprep.subr.mxu0 %v59
    %1006 = vmatpush1.msra.mxu0 %v58
    %1007 = vmatprep.subr.mxu0 %v55
    %1008 = vmatpush1.msra.mxu0 %v54
    %1009 = vmatprep.subr.mxu0 %v51
    %1010 = vmatpush1.msra.mxu0 %v50
    %1011 = vmatprep.subr.mxu0 %v47
    %1012 = vmatpush1.msra.mxu0 %v46
    %1013 = vmatprep.subr.mxu0 0.0
    %1014 = vmatpush2.msra.mxu0 0.0
    %1015 = vmatprep.subr.mxu0 0.0
    %1016 = vmatpush2.msra.mxu0 0.0
    %1017 = vmatprep.subr.mxu0 0.0
    %1018 = vmatpush2.msra.mxu0 0.0
    %1019 = vmatprep.subr.mxu0 0.0
    %1020 = vmatpush2.msra.mxu0 0.0
    %1021 = vmatprep.subr.mxu0 0.0
    %1022 = vmatpush2.msra.mxu0 0.0
    %1023 = vmatprep.subr.mxu0 0.0
    %1024 = vmatpush2.msra.mxu0 0.0
    %1025 = vmatprep.subr.mxu0 0.0
    %1026 = vmatpush2.msra.mxu0 0.0
    %1027 = vmatprep.subr.mxu0 0.0
    %1028 = vmatpush2.msra.mxu0 0.0
    %1029 = vmatprep.subr.mxu0 0.0
    %1030 = vmatpush2.msra.mxu0 0.0
    %1031 = vmatprep.subr.mxu0 0.0
    %1032 = vmatpush2.msra.mxu0 0.0
    %1033 = vmatprep.subr.mxu0 0.0
    %1034 = vmatpush2.msra.mxu0 0.0
    %1035 = vmatprep.subr.mxu0 0.0
    %1036 = vmatpush2.msra.mxu0 0.0
    %1037 = vmatprep.subr.mxu0 0.0
    %1038 = vmatpush2.msra.mxu0 0.0
    %1039 = vmatprep.subr.mxu0 0.0
    %1040 = vmatpush2.msra.mxu0 0.0
    %1041 = vmatprep.subr.mxu0 0.0
    %1042 = vmatpush2.msra.mxu0 0.0
    %1043 = vmatprep.subr.mxu0 0.0
    %1044 = vmatpush2.msra.mxu0 0.0
    %1045 = vmatprep.mubr.f32.mxu0 0.0
    %1046 = vmatmul.mubr.f32.gmra.mxu0 %v979
    %v1047 = vpop.f32.mrf.mxu0
    %v1048 = vadd.f32 0.0, %v1047
    %v1049 = vpop.f32.mrf.mxu0
    %v1050 = vadd.f32 0.0, %v1049
    %1051 = vdwg.mxu0
    %1052 = vmatprep.subr.mxu0 %v109
    %1053 = vmatpush1.msra.mxu0 %v108
    %1054 = vmatprep.subr.mxu0 %v105
    %1055 = vmatpush1.msra.mxu0 %v104
    %1056 = vmatprep.subr.mxu0 %v101
    %1057 = vmatpush1.msra.mxu0 %v100
    %1058 = vmatprep.subr.mxu0 %v97
    %1059 = vmatpush1.msra.mxu0 %v96
    %1060 = vmatprep.subr.mxu0 %v93
    %1061 = vmatpush1.msra.mxu0 %v92
    %1062 = vmatprep.subr.mxu0 %v89
    %1063 = vmatpush1.msra.mxu0 %v88
    %1064 = vmatprep.subr.mxu0 %v85
    %1065 = vmatpush1.msra.mxu0 %v84
    %1066 = vmatprep.subr.mxu0 %v81
    %1067 = vmatpush1.msra.mxu0 %v80
    %1068 = vmatprep.subr.mxu0 %v77
    %1069 = vmatpush1.msra.mxu0 %v76
    %1070 = vmatprep.subr.mxu0 %v73
    %1071 = vmatpush1.msra.mxu0 %v72
    %1072 = vmatprep.subr.mxu0 %v69
    %1073 = vmatpush1.msra.mxu0 %v68
    %1074 = vmatprep.subr.mxu0 %v65
    %1075 = vmatpush1.msra.mxu0 %v64
    %1076 = vmatprep.subr.mxu0 %v61
    %1077 = vmatpush1.msra.mxu0 %v60
    %1078 = vmatprep.subr.mxu0 %v57
    %1079 = vmatpush1.msra.mxu0 %v56
    %1080 = vmatprep.subr.mxu0 %v53
    %1081 = vmatpush1.msra.mxu0 %v52
    %1082 = vmatprep.subr.mxu0 %v49
    %1083 = vmatpush1.msra.mxu0 %v48
    %1084 = vmatprep.subr.mxu0 0.0
    %1085 = vmatpush2.msra.mxu0 0.0
    %1086 = vmatprep.subr.mxu0 0.0
    %1087 = vmatpush2.msra.mxu0 0.0
    %1088 = vmatprep.subr.mxu0 0.0
    %1089 = vmatpush2.msra.mxu0 0.0
    %1090 = vmatprep.subr.mxu0 0.0
    %1091 = vmatpush2.msra.mxu0 0.0
    %1092 = vmatprep.subr.mxu0 0.0
    %1093 = vmatpush2.msra.mxu0 0.0
    %1094 = vmatprep.subr.mxu0 0.0
    %1095 = vmatpush2.msra.mxu0 0.0
    %1096 = vmatprep.subr.mxu0 0.0
    %1097 = vmatpush2.msra.mxu0 0.0
    %1098 = vmatprep.subr.mxu0 0.0
    %1099 = vmatpush2.msra.mxu0 0.0
    %1100 = vmatprep.subr.mxu0 0.0
    %1101 = vmatpush2.msra.mxu0 0.0
    %1102 = vmatprep.subr.mxu0 0.0
    %1103 = vmatpush2.msra.mxu0 0.0
    %1104 = vmatprep.subr.mxu0 0.0
    %1105 = vmatpush2.msra.mxu0 0.0
    %1106 = vmatprep.subr.mxu0 0.0
    %1107 = vmatpush2.msra.mxu0 0.0
    %1108 = vmatprep.subr.mxu0 0.0
    %1109 = vmatpush2.msra.mxu0 0.0
    %1110 = vmatprep.subr.mxu0 0.0
    %1111 = vmatpush2.msra.mxu0 0.0
    %1112 = vmatprep.subr.mxu0 0.0
    %1113 = vmatpush2.msra.mxu0 0.0
    %1114 = vmatprep.subr.mxu0 0.0
    %1115 = vmatpush2.msra.mxu0 0.0
    %1116 = vmatprep.mubr.f32.mxu0 0.0
    %1117 = vmatmul.mubr.f32.gmra.mxu0 %v979
    %v1118 = vpop.f32.mrf.mxu0
    %v1119 = vadd.f32 0.0, %v1118
    %v1120 = vpop.f32.mrf.mxu0
    %v1121 = vadd.f32 0.0, %v1120
    %1122 = vdwg.mxu0
    %v1127 = vrot.slane %v1048, 5
    %v1128 = vrot.slane %v1050, 5
    %v1129 = vrot.slane %v1119, 5
    %v1130 = vrot.slane %v1121, 5
    %v1131 = vrot.slane %v1048, 6
    %v1132 = vrot.slane %v1050, 6
    %v1133 = vrot.slane %v1119, 6
    %v1134 = vrot.slane %v1121, 6
    %v1143 = vadd.f32 %v219, %v1127
    %v1144 = vadd.f32 %v221, %v1128
    %v1145 = vadd.f32 %v296, %v1129
    %v1146 = vadd.f32 %v298, %v1130
    %v1147 = vadd.f32 %v225, %v1131
    %v1148 = vadd.f32 %v227, %v1132
    %v1149 = vadd.f32 %v302, %v1133
    %v1150 = vadd.f32 %v304, %v1134
    %v1151 = vxor.u32 %v1143, 2147483648
    %v1152 = vxor.u32 %v1147, 2147483648
    %v1153 = vmul.f32 %v1151, 1.442695
    %v1154 = vpow.pop %v1153
    %v1155 = vmul.f32 %v1152, 1.442695
    %v1156 = vpow.pop %v1155
    %v1157 = vadd.f32 %v1154, 1.0
    %v1158 = vadd.f32 %v1156, 1.0
    %v1159 = vrcp.pop %v1157
    %v1160 = vmul.f32 1.0, %v1159
    %v1161 = vrcp.pop %v1158
    %v1162 = vmul.f32 1.0, %v1161
    %v1163 = vxor.u32 %v1144, 2147483648
    %v1164 = vxor.u32 %v1148, 2147483648
    %v1165 = vmul.f32 %v1163, 1.442695
    %v1166 = vpow.pop %v1165
    %v1167 = vmul.f32 %v1164, 1.442695
    %v1168 = vpow.pop %v1167
    %v1169 = vadd.f32 %v1166, 1.0
    %v1170 = vadd.f32 %v1168, 1.0
    %v1171 = vrcp.pop %v1169
    %v1172 = vmul.f32 1.0, %v1171
    %v1173 = vrcp.pop %v1170
    %v1174 = vmul.f32 1.0, %v1173
    %v1175 = vtanh.pop %v1145
    %v1176 = vtanh.pop %v1149
    %v1177 = vxor.u32 %v1146, 2147483648
    %v1178 = vxor.u32 %v1150, 2147483648
    %v1179 = vmul.f32 %v1177, 1.442695
    %v1180 = vpow.pop %v1179
    %v1181 = vmul.f32 %v1178, 1.442695
    %v1182 = vpow.pop %v1181
    %v1183 = vadd.f32 %v1180, 1.0
    %v1184 = vadd.f32 %v1182, 1.0
    %v1185 = vrcp.pop %v1183
    %v1186 = vmul.f32 1.0, %v1185
    %v1187 = vrcp.pop %v1184
    %v1188 = vmul.f32 1.0, %v1187
    %v1191 = vrot.slane %v969, 7
    %v1192 = vrot.slane %v970, 7
    %v1195 = vmul.f32 %v1172, %v1191
    %v1196 = vmul.f32 %v1174, %v1192
    %v1197 = vmul.f32 %v1160, %v1175
    %v1198 = vmul.f32 %v1162, %v1176
    %v1199 = vadd.f32 %v1195, %v1197
    %v1200 = vadd.f32 %v1196, %v1198
    %v1201 = vtanh.pop %v1199
    %v1202 = vtanh.pop %v1200
    %v1203 = vmul.f32 %v1186, %v1201
    %v1204 = vmul.f32 %v1188, %v1202
    %v1207 = vrot.slane %v1203, 3
    %v1208 = vrot.slane %v1204, 2
    %v1209 = vsel %vm523, %v1208, %v1207
    %1211 = vmatprep.subr.mxu0 %v107
    %1212 = vmatpush1.msra.mxu0 %v106
    %1213 = vmatprep.subr.mxu0 %v103
    %1214 = vmatpush1.msra.mxu0 %v102
    %1215 = vmatprep.subr.mxu0 %v99
    %1216 = vmatpush1.msra.mxu0 %v98
    %1217 = vmatprep.subr.mxu0 %v95
    %1218 = vmatpush1.msra.mxu0 %v94
    %1219 = vmatprep.subr.mxu0 %v91
    %1220 = vmatpush1.msra.mxu0 %v90
    %1221 = vmatprep.subr.mxu0 %v87
    %1222 = vmatpush1.msra.mxu0 %v86
    %1223 = vmatprep.subr.mxu0 %v83
    %1224 = vmatpush1.msra.mxu0 %v82
    %1225 = vmatprep.subr.mxu0 %v79
    %1226 = vmatpush1.msra.mxu0 %v78
    %1227 = vmatprep.subr.mxu0 %v75
    %1228 = vmatpush1.msra.mxu0 %v74
    %1229 = vmatprep.subr.mxu0 %v71
    %1230 = vmatpush1.msra.mxu0 %v70
    %1231 = vmatprep.subr.mxu0 %v67
    %1232 = vmatpush1.msra.mxu0 %v66
    %1233 = vmatprep.subr.mxu0 %v63
    %1234 = vmatpush1.msra.mxu0 %v62
    %1235 = vmatprep.subr.mxu0 %v59
    %1236 = vmatpush1.msra.mxu0 %v58
    %1237 = vmatprep.subr.mxu0 %v55
    %1238 = vmatpush1.msra.mxu0 %v54
    %1239 = vmatprep.subr.mxu0 %v51
    %1240 = vmatpush1.msra.mxu0 %v50
    %1241 = vmatprep.subr.mxu0 %v47
    %1242 = vmatpush1.msra.mxu0 %v46
    %1243 = vmatprep.subr.mxu0 0.0
    %1244 = vmatpush2.msra.mxu0 0.0
    %1245 = vmatprep.subr.mxu0 0.0
    %1246 = vmatpush2.msra.mxu0 0.0
    %1247 = vmatprep.subr.mxu0 0.0
    %1248 = vmatpush2.msra.mxu0 0.0
    %1249 = vmatprep.subr.mxu0 0.0
    %1250 = vmatpush2.msra.mxu0 0.0
    %1251 = vmatprep.subr.mxu0 0.0
    %1252 = vmatpush2.msra.mxu0 0.0
    %1253 = vmatprep.subr.mxu0 0.0
    %1254 = vmatpush2.msra.mxu0 0.0
    %1255 = vmatprep.subr.mxu0 0.0
    %1256 = vmatpush2.msra.mxu0 0.0
    %1257 = vmatprep.subr.mxu0 0.0
    %1258 = vmatpush2.msra.mxu0 0.0
    %1259 = vmatprep.subr.mxu0 0.0
    %1260 = vmatpush2.msra.mxu0 0.0
    %1261 = vmatprep.subr.mxu0 0.0
    %1262 = vmatpush2.msra.mxu0 0.0
    %1263 = vmatprep.subr.mxu0 0.0
    %1264 = vmatpush2.msra.mxu0 0.0
    %1265 = vmatprep.subr.mxu0 0.0
    %1266 = vmatpush2.msra.mxu0 0.0
    %1267 = vmatprep.subr.mxu0 0.0
    %1268 = vmatpush2.msra.mxu0 0.0
    %1269 = vmatprep.subr.mxu0 0.0
    %1270 = vmatpush2.msra.mxu0 0.0
    %1271 = vmatprep.subr.mxu0 0.0
    %1272 = vmatpush2.msra.mxu0 0.0
    %1273 = vmatprep.subr.mxu0 0.0
    %1274 = vmatpush2.msra.mxu0 0.0
    %1275 = vmatprep.mubr.f32.mxu0 0.0
    %1276 = vmatmul.mubr.f32.gmra.mxu0 %v1209
    %v1277 = vpop.f32.mrf.mxu0
    %v1278 = vadd.f32 0.0, %v1277
    %v1279 = vpop.f32.mrf.mxu0
    %v1280 = vadd.f32 0.0, %v1279
    %1281 = vdwg.mxu0
    %1282 = vmatprep.subr.mxu0 %v109
    %1283 = vmatpush1.msra.mxu0 %v108
    %1284 = vmatprep.subr.mxu0 %v105
    %1285 = vmatpush1.msra.mxu0 %v104
    %1286 = vmatprep.subr.mxu0 %v101
    %1287 = vmatpush1.msra.mxu0 %v100
    %1288 = vmatprep.subr.mxu0 %v97
    %1289 = vmatpush1.msra.mxu0 %v96
    %1290 = vmatprep.subr.mxu0 %v93
    %1291 = vmatpush1.msra.mxu0 %v92
    %1292 = vmatprep.subr.mxu0 %v89
    %1293 = vmatpush1.msra.mxu0 %v88
    %1294 = vmatprep.subr.mxu0 %v85
    %1295 = vmatpush1.msra.mxu0 %v84
    %1296 = vmatprep.subr.mxu0 %v81
    %1297 = vmatpush1.msra.mxu0 %v80
    %1298 = vmatprep.subr.mxu0 %v77
    %1299 = vmatpush1.msra.mxu0 %v76
    %1300 = vmatprep.subr.mxu0 %v73
    %1301 = vmatpush1.msra.mxu0 %v72
    %1302 = vmatprep.subr.mxu0 %v69
    %1303 = vmatpush1.msra.mxu0 %v68
    %1304 = vmatprep.subr.mxu0 %v65
    %1305 = vmatpush1.msra.mxu0 %v64
    %1306 = vmatprep.subr.mxu0 %v61
    %1307 = vmatpush1.msra.mxu0 %v60
    %1308 = vmatprep.subr.mxu0 %v57
    %1309 = vmatpush1.msra.mxu0 %v56
    %1310 = vmatprep.subr.mxu0 %v53
    %1311 = vmatpush1.msra.mxu0 %v52
    %1312 = vmatprep.subr.mxu0 %v49
    %1313 = vmatpush1.msra.mxu0 %v48
    %1314 = vmatprep.subr.mxu0 0.0
    %1315 = vmatpush2.msra.mxu0 0.0
    %1316 = vmatprep.subr.mxu0 0.0
    %1317 = vmatpush2.msra.mxu0 0.0
    %1318 = vmatprep.subr.mxu0 0.0
    %1319 = vmatpush2.msra.mxu0 0.0
    %1320 = vmatprep.subr.mxu0 0.0
    %1321 = vmatpush2.msra.mxu0 0.0
    %1322 = vmatprep.subr.mxu0 0.0
    %1323 = vmatpush2.msra.mxu0 0.0
    %1324 = vmatprep.subr.mxu0 0.0
    %1325 = vmatpush2.msra.mxu0 0.0
    %1326 = vmatprep.subr.mxu0 0.0
    %1327 = vmatpush2.msra.mxu0 0.0
    %1328 = vmatprep.subr.mxu0 0.0
    %1329 = vmatpush2.msra.mxu0 0.0
    %1330 = vmatprep.subr.mxu0 0.0
    %1331 = vmatpush2.msra.mxu0 0.0
    %1332 = vmatprep.subr.mxu0 0.0
    %1333 = vmatpush2.msra.mxu0 0.0
    %1334 = vmatprep.subr.mxu0 0.0
    %1335 = vmatpush2.msra.mxu0 0.0
    %1336 = vmatprep.subr.mxu0 0.0
    %1337 = vmatpush2.msra.mxu0 0.0
    %1338 = vmatprep.subr.mxu0 0.0
    %1339 = vmatpush2.msra.mxu0 0.0
    %1340 = vmatprep.subr.mxu0 0.0
    %1341 = vmatpush2.msra.mxu0 0.0
    %1342 = vmatprep.subr.mxu0 0.0
    %1343 = vmatpush2.msra.mxu0 0.0
    %1344 = vmatprep.subr.mxu0 0.0
    %1345 = vmatpush2.msra.mxu0 0.0
    %1346 = vmatprep.mubr.f32.mxu0 0.0
    %1347 = vmatmul.mubr.f32.gmra.mxu0 %v1209
    %v1348 = vpop.f32.mrf.mxu0
    %v1349 = vadd.f32 0.0, %v1348
    %v1350 = vpop.f32.mrf.mxu0
    %v1351 = vadd.f32 0.0, %v1350
    %1352 = vdwg.mxu0
    %v1357 = vrot.slane %v1278, 4
    %v1358 = vrot.slane %v1280, 4
    %v1359 = vrot.slane %v1349, 4
    %v1360 = vrot.slane %v1351, 4
    %v1361 = vrot.slane %v1278, 5
    %v1362 = vrot.slane %v1280, 5
    %v1363 = vrot.slane %v1349, 5
    %v1364 = vrot.slane %v1351, 5
    %v1373 = vadd.f32 %v219, %v1357
    %v1374 = vadd.f32 %v221, %v1358
    %v1375 = vadd.f32 %v296, %v1359
    %v1376 = vadd.f32 %v298, %v1360
    %v1377 = vadd.f32 %v225, %v1361
    %v1378 = vadd.f32 %v227, %v1362
    %v1379 = vadd.f32 %v302, %v1363
    %v1380 = vadd.f32 %v304, %v1364
    %v1381 = vxor.u32 %v1373, 2147483648
    %v1382 = vxor.u32 %v1377, 2147483648
    %v1383 = vmul.f32 %v1381, 1.442695
    %v1384 = vpow.pop %v1383
    %v1385 = vmul.f32 %v1382, 1.442695
    %v1386 = vpow.pop %v1385
    %v1387 = vadd.f32 %v1384, 1.0
    %v1388 = vadd.f32 %v1386, 1.0
    %v1389 = vrcp.pop %v1387
    %v1390 = vmul.f32 1.0, %v1389
    %v1391 = vrcp.pop %v1388
    %v1392 = vmul.f32 1.0, %v1391
    %v1393 = vxor.u32 %v1374, 2147483648
    %v1394 = vxor.u32 %v1378, 2147483648
    %v1395 = vmul.f32 %v1393, 1.442695
    %v1396 = vpow.pop %v1395
    %v1397 = vmul.f32 %v1394, 1.442695
    %v1398 = vpow.pop %v1397
    %v1399 = vadd.f32 %v1396, 1.0
    %v1400 = vadd.f32 %v1398, 1.0
    %v1401 = vrcp.pop %v1399
    %v1402 = vmul.f32 1.0, %v1401
    %v1403 = vrcp.pop %v1400
    %v1404 = vmul.f32 1.0, %v1403
    %v1405 = vtanh.pop %v1375
    %v1406 = vtanh.pop %v1379
    %v1407 = vxor.u32 %v1376, 2147483648
    %v1408 = vxor.u32 %v1380, 2147483648
    %v1409 = vmul.f32 %v1407, 1.442695
    %v1410 = vpow.pop %v1409
    %v1411 = vmul.f32 %v1408, 1.442695
    %v1412 = vpow.pop %v1411
    %v1413 = vadd.f32 %v1410, 1.0
    %v1414 = vadd.f32 %v1412, 1.0
    %v1415 = vrcp.pop %v1413
    %v1416 = vmul.f32 1.0, %v1415
    %v1417 = vrcp.pop %v1414
    %v1418 = vmul.f32 1.0, %v1417
    %v1421 = vrot.slane %v1199, 7
    %v1422 = vrot.slane %v1200, 7
    %v1425 = vmul.f32 %v1402, %v1421
    %v1426 = vmul.f32 %v1404, %v1422
    %v1427 = vmul.f32 %v1390, %v1405
    %v1428 = vmul.f32 %v1392, %v1406
    %v1429 = vadd.f32 %v1425, %v1427
    %v1430 = vadd.f32 %v1426, %v1428
    %v1431 = vtanh.pop %v1429
    %v1432 = vtanh.pop %v1430
    %v1433 = vmul.f32 %v1416, %v1431
    %v1434 = vmul.f32 %v1418, %v1432
    %v1437 = vrot.slane %v1433, 4
    %v1438 = vrot.slane %v1434, 3
    %v1439 = vsel %vm523, %v1438, %v1437
    %1441 = vmatprep.subr.mxu0 %v107
    %1442 = vmatpush1.msra.mxu0 %v106
    %1443 = vmatprep.subr.mxu0 %v103
    %1444 = vmatpush1.msra.mxu0 %v102
    %1445 = vmatprep.subr.mxu0 %v99
    %1446 = vmatpush1.msra.mxu0 %v98
    %1447 = vmatprep.subr.mxu0 %v95
    %1448 = vmatpush1.msra.mxu0 %v94
    %1449 = vmatprep.subr.mxu0 %v91
    %1450 = vmatpush1.msra.mxu0 %v90
    %1451 = vmatprep.subr.mxu0 %v87
    %1452 = vmatpush1.msra.mxu0 %v86
    %1453 = vmatprep.subr.mxu0 %v83
    %1454 = vmatpush1.msra.mxu0 %v82
    %1455 = vmatprep.subr.mxu0 %v79
    %1456 = vmatpush1.msra.mxu0 %v78
    %1457 = vmatprep.subr.mxu0 %v75
    %1458 = vmatpush1.msra.mxu0 %v74
    %1459 = vmatprep.subr.mxu0 %v71
    %1460 = vmatpush1.msra.mxu0 %v70
    %1461 = vmatprep.subr.mxu0 %v67
    %1462 = vmatpush1.msra.mxu0 %v66
    %1463 = vmatprep.subr.mxu0 %v63
    %1464 = vmatpush1.msra.mxu0 %v62
    %1465 = vmatprep.subr.mxu0 %v59
    %1466 = vmatpush1.msra.mxu0 %v58
    %1467 = vmatprep.subr.mxu0 %v55
    %1468 = vmatpush1.msra.mxu0 %v54
    %1469 = vmatprep.subr.mxu0 %v51
    %1470 = vmatpush1.msra.mxu0 %v50
    %1471 = vmatprep.subr.mxu0 %v47
    %1472 = vmatpush1.msra.mxu0 %v46
    %1473 = vmatprep.subr.mxu0 0.0
    %1474 = vmatpush2.msra.mxu0 0.0
    %1475 = vmatprep.subr.mxu0 0.0
    %1476 = vmatpush2.msra.mxu0 0.0
    %1477 = vmatprep.subr.mxu0 0.0
    %1478 = vmatpush2.msra.mxu0 0.0
    %1479 = vmatprep.subr.mxu0 0.0
    %1480 = vmatpush2.msra.mxu0 0.0
    %1481 = vmatprep.subr.mxu0 0.0
    %1482 = vmatpush2.msra.mxu0 0.0
    %1483 = vmatprep.subr.mxu0 0.0
    %1484 = vmatpush2.msra.mxu0 0.0
    %1485 = vmatprep.subr.mxu0 0.0
    %1486 = vmatpush2.msra.mxu0 0.0
    %1487 = vmatprep.subr.mxu0 0.0
    %1488 = vmatpush2.msra.mxu0 0.0
    %1489 = vmatprep.subr.mxu0 0.0
    %1490 = vmatpush2.msra.mxu0 0.0
    %1491 = vmatprep.subr.mxu0 0.0
    %1492 = vmatpush2.msra.mxu0 0.0
    %1493 = vmatprep.subr.mxu0 0.0
    %1494 = vmatpush2.msra.mxu0 0.0
    %1495 = vmatprep.subr.mxu0 0.0
    %1496 = vmatpush2.msra.mxu0 0.0
    %1497 = vmatprep.subr.mxu0 0.0
    %1498 = vmatpush2.msra.mxu0 0.0
    %1499 = vmatprep.subr.mxu0 0.0
    %1500 = vmatpush2.msra.mxu0 0.0
    %1501 = vmatprep.subr.mxu0 0.0
    %1502 = vmatpush2.msra.mxu0 0.0
    %1503 = vmatprep.subr.mxu0 0.0
    %1504 = vmatpush2.msra.mxu0 0.0
    %1505 = vmatprep.mubr.f32.mxu0 0.0
    %1506 = vmatmul.mubr.f32.gmra.mxu0 %v1439
    %v1507 = vpop.f32.mrf.mxu0
    %v1508 = vadd.f32 0.0, %v1507
    %v1509 = vpop.f32.mrf.mxu0
    %v1510 = vadd.f32 0.0, %v1509
    %1511 = vdwg.mxu0
    %1512 = vmatprep.subr.mxu0 %v109
    %1513 = vmatpush1.msra.mxu0 %v108
    %1514 = vmatprep.subr.mxu0 %v105
    %1515 = vmatpush1.msra.mxu0 %v104
    %1516 = vmatprep.subr.mxu0 %v101
    %1517 = vmatpush1.msra.mxu0 %v100
    %1518 = vmatprep.subr.mxu0 %v97
    %1519 = vmatpush1.msra.mxu0 %v96
    %1520 = vmatprep.subr.mxu0 %v93
    %1521 = vmatpush1.msra.mxu0 %v92
    %1522 = vmatprep.subr.mxu0 %v89
    %1523 = vmatpush1.msra.mxu0 %v88
    %1524 = vmatprep.subr.mxu0 %v85
    %1525 = vmatpush1.msra.mxu0 %v84
    %1526 = vmatprep.subr.mxu0 %v81
    %1527 = vmatpush1.msra.mxu0 %v80
    %1528 = vmatprep.subr.mxu0 %v77
    %1529 = vmatpush1.msra.mxu0 %v76
    %1530 = vmatprep.subr.mxu0 %v73
    %1531 = vmatpush1.msra.mxu0 %v72
    %1532 = vmatprep.subr.mxu0 %v69
    %1533 = vmatpush1.msra.mxu0 %v68
    %1534 = vmatprep.subr.mxu0 %v65
    %1535 = vmatpush1.msra.mxu0 %v64
    %1536 = vmatprep.subr.mxu0 %v61
    %1537 = vmatpush1.msra.mxu0 %v60
    %1538 = vmatprep.subr.mxu0 %v57
    %1539 = vmatpush1.msra.mxu0 %v56
    %1540 = vmatprep.subr.mxu0 %v53
    %1541 = vmatpush1.msra.mxu0 %v52
    %1542 = vmatprep.subr.mxu0 %v49
    %1543 = vmatpush1.msra.mxu0 %v48
    %1544 = vmatprep.subr.mxu0 0.0
    %1545 = vmatpush2.msra.mxu0 0.0
    %1546 = vmatprep.subr.mxu0 0.0
    %1547 = vmatpush2.msra.mxu0 0.0
    %1548 = vmatprep.subr.mxu0 0.0
    %1549 = vmatpush2.msra.mxu0 0.0
    %1550 = vmatprep.subr.mxu0 0.0
    %1551 = vmatpush2.msra.mxu0 0.0
    %1552 = vmatprep.subr.mxu0 0.0
    %1553 = vmatpush2.msra.mxu0 0.0
    %1554 = vmatprep.subr.mxu0 0.0
    %1555 = vmatpush2.msra.mxu0 0.0
    %1556 = vmatprep.subr.mxu0 0.0
    %1557 = vmatpush2.msra.mxu0 0.0
    %1558 = vmatprep.subr.mxu0 0.0
    %1559 = vmatpush2.msra.mxu0 0.0
    %1560 = vmatprep.subr.mxu0 0.0
    %1561 = vmatpush2.msra.mxu0 0.0
    %1562 = vmatprep.subr.mxu0 0.0
    %1563 = vmatpush2.msra.mxu0 0.0
    %1564 = vmatprep.subr.mxu0 0.0
    %1565 = vmatpush2.msra.mxu0 0.0
    %1566 = vmatprep.subr.mxu0 0.0
    %1567 = vmatpush2.msra.mxu0 0.0
    %1568 = vmatprep.subr.mxu0 0.0
    %1569 = vmatpush2.msra.mxu0 0.0
    %1570 = vmatprep.subr.mxu0 0.0
    %1571 = vmatpush2.msra.mxu0 0.0
    %1572 = vmatprep.subr.mxu0 0.0
    %1573 = vmatpush2.msra.mxu0 0.0
    %1574 = vmatprep.subr.mxu0 0.0
    %1575 = vmatpush2.msra.mxu0 0.0
    %1576 = vmatprep.mubr.f32.mxu0 0.0
    %1577 = vmatmul.mubr.f32.gmra.mxu0 %v1439
    %v1578 = vpop.f32.mrf.mxu0
    %v1579 = vadd.f32 0.0, %v1578
    %v1580 = vpop.f32.mrf.mxu0
    %v1581 = vadd.f32 0.0, %v1580
    %1582 = vdwg.mxu0
    %v1587 = vrot.slane %v1508, 3
    %v1588 = vrot.slane %v1510, 3
    %v1589 = vrot.slane %v1579, 3
    %v1590 = vrot.slane %v1581, 3
    %v1591 = vrot.slane %v1508, 4
    %v1592 = vrot.slane %v1510, 4
    %v1593 = vrot.slane %v1579, 4
    %v1594 = vrot.slane %v1581, 4
    %v1603 = vadd.f32 %v219, %v1587
    %v1604 = vadd.f32 %v221, %v1588
    %v1605 = vadd.f32 %v296, %v1589
    %v1606 = vadd.f32 %v298, %v1590
    %v1607 = vadd.f32 %v225, %v1591
    %v1608 = vadd.f32 %v227, %v1592
    %v1609 = vadd.f32 %v302, %v1593
    %v1610 = vadd.f32 %v304, %v1594
    %v1611 = vxor.u32 %v1603, 2147483648
    %v1612 = vxor.u32 %v1607, 2147483648
    %v1613 = vmul.f32 %v1611, 1.442695
    %v1614 = vpow.pop %v1613
    %v1615 = vmul.f32 %v1612, 1.442695
    %v1616 = vpow.pop %v1615
    %v1617 = vadd.f32 %v1614, 1.0
    %v1618 = vadd.f32 %v1616, 1.0
    %v1619 = vrcp.pop %v1617
    %v1620 = vmul.f32 1.0, %v1619
    %v1621 = vrcp.pop %v1618
    %v1622 = vmul.f32 1.0, %v1621
    %v1623 = vxor.u32 %v1604, 2147483648
    %v1624 = vxor.u32 %v1608, 2147483648
    %v1625 = vmul.f32 %v1623, 1.442695
    %v1626 = vpow.pop %v1625
    %v1627 = vmul.f32 %v1624, 1.442695
    %v1628 = vpow.pop %v1627
    %v1629 = vadd.f32 %v1626, 1.0
    %v1630 = vadd.f32 %v1628, 1.0
    %v1631 = vrcp.pop %v1629
    %v1632 = vmul.f32 1.0, %v1631
    %v1633 = vrcp.pop %v1630
    %v1634 = vmul.f32 1.0, %v1633
    %v1635 = vtanh.pop %v1605
    %v1636 = vtanh.pop %v1609
    %v1637 = vxor.u32 %v1606, 2147483648
    %v1638 = vxor.u32 %v1610, 2147483648
    %v1639 = vmul.f32 %v1637, 1.442695
    %v1640 = vpow.pop %v1639
    %v1641 = vmul.f32 %v1638, 1.442695
    %v1642 = vpow.pop %v1641
    %v1643 = vadd.f32 %v1640, 1.0
    %v1644 = vadd.f32 %v1642, 1.0
    %v1645 = vrcp.pop %v1643
    %v1646 = vmul.f32 1.0, %v1645
    %v1647 = vrcp.pop %v1644
    %v1648 = vmul.f32 1.0, %v1647
    %v1651 = vrot.slane %v1429, 7
    %v1652 = vrot.slane %v1430, 7
    %v1655 = vmul.f32 %v1632, %v1651
    %v1656 = vmul.f32 %v1634, %v1652
    %v1657 = vmul.f32 %v1620, %v1635
    %v1658 = vmul.f32 %v1622, %v1636
    %v1659 = vadd.f32 %v1655, %v1657
    %v1660 = vadd.f32 %v1656, %v1658
    %v1661 = vtanh.pop %v1659
    %v1662 = vtanh.pop %v1660
    %v1663 = vmul.f32 %v1646, %v1661
    %v1664 = vmul.f32 %v1648, %v1662
    %v1667 = vrot.slane %v1663, 5
    %v1668 = vrot.slane %v1664, 4
    %v1669 = vsel %vm523, %v1668, %v1667
    %1671 = vmatprep.subr.mxu0 %v107
    %1672 = vmatpush1.msra.mxu0 %v106
    %1673 = vmatprep.subr.mxu0 %v103
    %1674 = vmatpush1.msra.mxu0 %v102
    %1675 = vmatprep.subr.mxu0 %v99
    %1676 = vmatpush1.msra.mxu0 %v98
    %1677 = vmatprep.subr.mxu0 %v95
    %1678 = vmatpush1.msra.mxu0 %v94
    %1679 = vmatprep.subr.mxu0 %v91
    %1680 = vmatpush1.msra.mxu0 %v90
    %1681 = vmatprep.subr.mxu0 %v87
    %1682 = vmatpush1.msra.mxu0 %v86
    %1683 = vmatprep.subr.mxu0 %v83
    %1684 = vmatpush1.msra.mxu0 %v82
    %1685 = vmatprep.subr.mxu0 %v79
    %1686 = vmatpush1.msra.mxu0 %v78
    %1687 = vmatprep.subr.mxu0 %v75
    %1688 = vmatpush1.msra.mxu0 %v74
    %1689 = vmatprep.subr.mxu0 %v71
    %1690 = vmatpush1.msra.mxu0 %v70
    %1691 = vmatprep.subr.mxu0 %v67
    %1692 = vmatpush1.msra.mxu0 %v66
    %1693 = vmatprep.subr.mxu0 %v63
    %1694 = vmatpush1.msra.mxu0 %v62
    %1695 = vmatprep.subr.mxu0 %v59
    %1696 = vmatpush1.msra.mxu0 %v58
    %1697 = vmatprep.subr.mxu0 %v55
    %1698 = vmatpush1.msra.mxu0 %v54
    %1699 = vmatprep.subr.mxu0 %v51
    %1700 = vmatpush1.msra.mxu0 %v50
    %1701 = vmatprep.subr.mxu0 %v47
    %1702 = vmatpush1.msra.mxu0 %v46
    %1703 = vmatprep.subr.mxu0 0.0
    %1704 = vmatpush2.msra.mxu0 0.0
    %1705 = vmatprep.subr.mxu0 0.0
    %1706 = vmatpush2.msra.mxu0 0.0
    %1707 = vmatprep.subr.mxu0 0.0
    %1708 = vmatpush2.msra.mxu0 0.0
    %1709 = vmatprep.subr.mxu0 0.0
    %1710 = vmatpush2.msra.mxu0 0.0
    %1711 = vmatprep.subr.mxu0 0.0
    %1712 = vmatpush2.msra.mxu0 0.0
    %1713 = vmatprep.subr.mxu0 0.0
    %1714 = vmatpush2.msra.mxu0 0.0
    %1715 = vmatprep.subr.mxu0 0.0
    %1716 = vmatpush2.msra.mxu0 0.0
    %1717 = vmatprep.subr.mxu0 0.0
    %1718 = vmatpush2.msra.mxu0 0.0
    %1719 = vmatprep.subr.mxu0 0.0
    %1720 = vmatpush2.msra.mxu0 0.0
    %1721 = vmatprep.subr.mxu0 0.0
    %1722 = vmatpush2.msra.mxu0 0.0
    %1723 = vmatprep.subr.mxu0 0.0
    %1724 = vmatpush2.msra.mxu0 0.0
    %1725 = vmatprep.subr.mxu0 0.0
    %1726 = vmatpush2.msra.mxu0 0.0
    %1727 = vmatprep.subr.mxu0 0.0
    %1728 = vmatpush2.msra.mxu0 0.0
    %1729 = vmatprep.subr.mxu0 0.0
    %1730 = vmatpush2.msra.mxu0 0.0
    %1731 = vmatprep.subr.mxu0 0.0
    %1732 = vmatpush2.msra.mxu0 0.0
    %1733 = vmatprep.subr.mxu0 0.0
    %1734 = vmatpush2.msra.mxu0 0.0
    %1735 = vmatprep.mubr.f32.mxu0 0.0
    %1736 = vmatmul.mubr.f32.gmra.mxu0 %v1669
    %v1737 = vpop.f32.mrf.mxu0
    %v1738 = vadd.f32 0.0, %v1737
    %v1739 = vpop.f32.mrf.mxu0
    %v1740 = vadd.f32 0.0, %v1739
    %1741 = vdwg.mxu0
    %1742 = vmatprep.subr.mxu0 %v109
    %1743 = vmatpush1.msra.mxu0 %v108
    %1744 = vmatprep.subr.mxu0 %v105
    %1745 = vmatpush1.msra.mxu0 %v104
    %1746 = vmatprep.subr.mxu0 %v101
    %1747 = vmatpush1.msra.mxu0 %v100
    %1748 = vmatprep.subr.mxu0 %v97
    %1749 = vmatpush1.msra.mxu0 %v96
    %1750 = vmatprep.subr.mxu0 %v93
    %1751 = vmatpush1.msra.mxu0 %v92
    %1752 = vmatprep.subr.mxu0 %v89
    %1753 = vmatpush1.msra.mxu0 %v88
    %1754 = vmatprep.subr.mxu0 %v85
    %1755 = vmatpush1.msra.mxu0 %v84
    %1756 = vmatprep.subr.mxu0 %v81
    %1757 = vmatpush1.msra.mxu0 %v80
    %1758 = vmatprep.subr.mxu0 %v77
    %1759 = vmatpush1.msra.mxu0 %v76
    %1760 = vmatprep.subr.mxu0 %v73
    %1761 = vmatpush1.msra.mxu0 %v72
    %1762 = vmatprep.subr.mxu0 %v69
    %1763 = vmatpush1.msra.mxu0 %v68
    %1764 = vmatprep.subr.mxu0 %v65
    %1765 = vmatpush1.msra.mxu0 %v64
    %1766 = vmatprep.subr.mxu0 %v61
    %1767 = vmatpush1.msra.mxu0 %v60
    %1768 = vmatprep.subr.mxu0 %v57
    %1769 = vmatpush1.msra.mxu0 %v56
    %1770 = vmatprep.subr.mxu0 %v53
    %1771 = vmatpush1.msra.mxu0 %v52
    %1772 = vmatprep.subr.mxu0 %v49
    %1773 = vmatpush1.msra.mxu0 %v48
    %1774 = vmatprep.subr.mxu0 0.0
    %1775 = vmatpush2.msra.mxu0 0.0
    %1776 = vmatprep.subr.mxu0 0.0
    %1777 = vmatpush2.msra.mxu0 0.0
    %1778 = vmatprep.subr.mxu0 0.0
    %1779 = vmatpush2.msra.mxu0 0.0
    %1780 = vmatprep.subr.mxu0 0.0
    %1781 = vmatpush2.msra.mxu0 0.0
    %1782 = vmatprep.subr.mxu0 0.0
    %1783 = vmatpush2.msra.mxu0 0.0
    %1784 = vmatprep.subr.mxu0 0.0
    %1785 = vmatpush2.msra.mxu0 0.0
    %1786 = vmatprep.subr.mxu0 0.0
    %1787 = vmatpush2.msra.mxu0 0.0
    %1788 = vmatprep.subr.mxu0 0.0
    %1789 = vmatpush2.msra.mxu0 0.0
    %1790 = vmatprep.subr.mxu0 0.0
    %1791 = vmatpush2.msra.mxu0 0.0
    %1792 = vmatprep.subr.mxu0 0.0
    %1793 = vmatpush2.msra.mxu0 0.0
    %1794 = vmatprep.subr.mxu0 0.0
    %1795 = vmatpush2.msra.mxu0 0.0
    %1796 = vmatprep.subr.mxu0 0.0
    %1797 = vmatpush2.msra.mxu0 0.0
    %1798 = vmatprep.subr.mxu0 0.0
    %1799 = vmatpush2.msra.mxu0 0.0
    %1800 = vmatprep.subr.mxu0 0.0
    %1801 = vmatpush2.msra.mxu0 0.0
    %1802 = vmatprep.subr.mxu0 0.0
    %1803 = vmatpush2.msra.mxu0 0.0
    %1804 = vmatprep.subr.mxu0 0.0
    %1805 = vmatpush2.msra.mxu0 0.0
    %1806 = vmatprep.mubr.f32.mxu0 0.0
    %1807 = vmatmul.mubr.f32.gmra.mxu0 %v1669
    %v1808 = vpop.f32.mrf.mxu0
    %v1809 = vadd.f32 0.0, %v1808
    %v1810 = vpop.f32.mrf.mxu0
    %v1811 = vadd.f32 0.0, %v1810
    %1812 = vdwg.mxu0
    %v1817 = vrot.slane %v1738, 2
    %v1818 = vrot.slane %v1740, 2
    %v1819 = vrot.slane %v1809, 2
    %v1820 = vrot.slane %v1811, 2
    %v1821 = vrot.slane %v1738, 3
    %v1822 = vrot.slane %v1740, 3
    %v1823 = vrot.slane %v1809, 3
    %v1824 = vrot.slane %v1811, 3
    %v1833 = vadd.f32 %v219, %v1817
    %v1834 = vadd.f32 %v221, %v1818
    %v1835 = vadd.f32 %v296, %v1819
    %v1836 = vadd.f32 %v298, %v1820
    %v1837 = vadd.f32 %v225, %v1821
    %v1838 = vadd.f32 %v227, %v1822
    %v1839 = vadd.f32 %v302, %v1823
    %v1840 = vadd.f32 %v304, %v1824
    %v1841 = vxor.u32 %v1833, 2147483648
    %v1842 = vxor.u32 %v1837, 2147483648
    %v1843 = vmul.f32 %v1841, 1.442695
    %v1844 = vpow.pop %v1843
    %v1845 = vmul.f32 %v1842, 1.442695
    %v1846 = vpow.pop %v1845
    %v1847 = vadd.f32 %v1844, 1.0
    %v1848 = vadd.f32 %v1846, 1.0
    %v1849 = vrcp.pop %v1847
    %v1850 = vmul.f32 1.0, %v1849
    %v1851 = vrcp.pop %v1848
    %v1852 = vmul.f32 1.0, %v1851
    %v1853 = vxor.u32 %v1834, 2147483648
    %v1854 = vxor.u32 %v1838, 2147483648
    %v1855 = vmul.f32 %v1853, 1.442695
    %v1856 = vpow.pop %v1855
    %v1857 = vmul.f32 %v1854, 1.442695
    %v1858 = vpow.pop %v1857
    %v1859 = vadd.f32 %v1856, 1.0
    %v1860 = vadd.f32 %v1858, 1.0
    %v1861 = vrcp.pop %v1859
    %v1862 = vmul.f32 1.0, %v1861
    %v1863 = vrcp.pop %v1860
    %v1864 = vmul.f32 1.0, %v1863
    %v1865 = vtanh.pop %v1835
    %v1866 = vtanh.pop %v1839
    %v1867 = vxor.u32 %v1836, 2147483648
    %v1868 = vxor.u32 %v1840, 2147483648
    %v1869 = vmul.f32 %v1867, 1.442695
    %v1870 = vpow.pop %v1869
    %v1871 = vmul.f32 %v1868, 1.442695
    %v1872 = vpow.pop %v1871
    %v1873 = vadd.f32 %v1870, 1.0
    %v1874 = vadd.f32 %v1872, 1.0
    %v1875 = vrcp.pop %v1873
    %v1876 = vmul.f32 1.0, %v1875
    %v1877 = vrcp.pop %v1874
    %v1878 = vmul.f32 1.0, %v1877
    %v1881 = vrot.slane %v1659, 7
    %v1882 = vrot.slane %v1660, 7
    %v1885 = vmul.f32 %v1862, %v1881
    %v1886 = vmul.f32 %v1864, %v1882
    %v1887 = vmul.f32 %v1850, %v1865
    %v1888 = vmul.f32 %v1852, %v1866
    %v1889 = vadd.f32 %v1885, %v1887
    %v1890 = vadd.f32 %v1886, %v1888
    %v1891 = vtanh.pop %v1889
    %v1892 = vtanh.pop %v1890
    %v1893 = vmul.f32 %v1876, %v1891
    %v1894 = vmul.f32 %v1878, %v1892
    %v1897 = vrot.slane %v1893, 6
    %v1898 = vrot.slane %v1894, 5
    %v1899 = vsel %vm523, %v1898, %v1897
    %1901 = vmatprep.subr.mxu0 %v107
    %1902 = vmatpush1.msra.mxu0 %v106
    %1903 = vmatprep.subr.mxu0 %v103
    %1904 = vmatpush1.msra.mxu0 %v102
    %1905 = vmatprep.subr.mxu0 %v99
    %1906 = vmatpush1.msra.mxu0 %v98
    %1907 = vmatprep.subr.mxu0 %v95
    %1908 = vmatpush1.msra.mxu0 %v94
    %1909 = vmatprep.subr.mxu0 %v91
    %1910 = vmatpush1.msra.mxu0 %v90
    %1911 = vmatprep.subr.mxu0 %v87
    %1912 = vmatpush1.msra.mxu0 %v86
    %1913 = vmatprep.subr.mxu0 %v83
    %1914 = vmatpush1.msra.mxu0 %v82
    %1915 = vmatprep.subr.mxu0 %v79
    %1916 = vmatpush1.msra.mxu0 %v78
    %1917 = vmatprep.subr.mxu0 %v75
    %1918 = vmatpush1.msra.mxu0 %v74
    %1919 = vmatprep.subr.mxu0 %v71
    %1920 = vmatpush1.msra.mxu0 %v70
    %1921 = vmatprep.subr.mxu0 %v67
    %1922 = vmatpush1.msra.mxu0 %v66
    %1923 = vmatprep.subr.mxu0 %v63
    %1924 = vmatpush1.msra.mxu0 %v62
    %1925 = vmatprep.subr.mxu0 %v59
    %1926 = vmatpush1.msra.mxu0 %v58
    %1927 = vmatprep.subr.mxu0 %v55
    %1928 = vmatpush1.msra.mxu0 %v54
    %1929 = vmatprep.subr.mxu0 %v51
    %1930 = vmatpush1.msra.mxu0 %v50
    %1931 = vmatprep.subr.mxu0 %v47
    %1932 = vmatpush1.msra.mxu0 %v46
    %1933 = vmatprep.subr.mxu0 0.0
    %1934 = vmatpush2.msra.mxu0 0.0
    %1935 = vmatprep.subr.mxu0 0.0
    %1936 = vmatpush2.msra.mxu0 0.0
    %1937 = vmatprep.subr.mxu0 0.0
    %1938 = vmatpush2.msra.mxu0 0.0
    %1939 = vmatprep.subr.mxu0 0.0
    %1940 = vmatpush2.msra.mxu0 0.0
    %1941 = vmatprep.subr.mxu0 0.0
    %1942 = vmatpush2.msra.mxu0 0.0
    %1943 = vmatprep.subr.mxu0 0.0
    %1944 = vmatpush2.msra.mxu0 0.0
    %1945 = vmatprep.subr.mxu0 0.0
    %1946 = vmatpush2.msra.mxu0 0.0
    %1947 = vmatprep.subr.mxu0 0.0
    %1948 = vmatpush2.msra.mxu0 0.0
    %1949 = vmatprep.subr.mxu0 0.0
    %1950 = vmatpush2.msra.mxu0 0.0
    %1951 = vmatprep.subr.mxu0 0.0
    %1952 = vmatpush2.msra.mxu0 0.0
    %1953 = vmatprep.subr.mxu0 0.0
    %1954 = vmatpush2.msra.mxu0 0.0
    %1955 = vmatprep.subr.mxu0 0.0
    %1956 = vmatpush2.msra.mxu0 0.0
    %1957 = vmatprep.subr.mxu0 0.0
    %1958 = vmatpush2.msra.mxu0 0.0
    %1959 = vmatprep.subr.mxu0 0.0
    %1960 = vmatpush2.msra.mxu0 0.0
    %1961 = vmatprep.subr.mxu0 0.0
    %1962 = vmatpush2.msra.mxu0 0.0
    %1963 = vmatprep.subr.mxu0 0.0
    %1964 = vmatpush2.msra.mxu0 0.0
    %1965 = vmatprep.mubr.f32.mxu0 0.0
    %1966 = vmatmul.mubr.f32.gmra.mxu0 %v1899
    %v1967 = vpop.f32.mrf.mxu0
    %v1968 = vadd.f32 0.0, %v1967
    %v1969 = vpop.f32.mrf.mxu0
    %v1970 = vadd.f32 0.0, %v1969
    %1971 = vdwg.mxu0
    %1972 = vmatprep.subr.mxu0 %v109
    %1973 = vmatpush1.msra.mxu0 %v108
    %1974 = vmatprep.subr.mxu0 %v105
    %1975 = vmatpush1.msra.mxu0 %v104
    %1976 = vmatprep.subr.mxu0 %v101
    %1977 = vmatpush1.msra.mxu0 %v100
    %1978 = vmatprep.subr.mxu0 %v97
    %1979 = vmatpush1.msra.mxu0 %v96
    %1980 = vmatprep.subr.mxu0 %v93
    %1981 = vmatpush1.msra.mxu0 %v92
    %1982 = vmatprep.subr.mxu0 %v89
    %1983 = vmatpush1.msra.mxu0 %v88
    %1984 = vmatprep.subr.mxu0 %v85
    %1985 = vmatpush1.msra.mxu0 %v84
    %1986 = vmatprep.subr.mxu0 %v81
    %1987 = vmatpush1.msra.mxu0 %v80
    %1988 = vmatprep.subr.mxu0 %v77
    %1989 = vmatpush1.msra.mxu0 %v76
    %1990 = vmatprep.subr.mxu0 %v73
    %1991 = vmatpush1.msra.mxu0 %v72
    %1992 = vmatprep.subr.mxu0 %v69
    %1993 = vmatpush1.msra.mxu0 %v68
    %1994 = vmatprep.subr.mxu0 %v65
    %1995 = vmatpush1.msra.mxu0 %v64
    %1996 = vmatprep.subr.mxu0 %v61
    %1997 = vmatpush1.msra.mxu0 %v60
    %1998 = vmatprep.subr.mxu0 %v57
    %1999 = vmatpush1.msra.mxu0 %v56
    %2000 = vmatprep.subr.mxu0 %v53
    %2001 = vmatpush1.msra.mxu0 %v52
    %2002 = vmatprep.subr.mxu0 %v49
    %2003 = vmatpush1.msra.mxu0 %v48
    %2004 = vmatprep.subr.mxu0 0.0
    %2005 = vmatpush2.msra.mxu0 0.0
    %2006 = vmatprep.subr.mxu0 0.0
    %2007 = vmatpush2.msra.mxu0 0.0
    %2008 = vmatprep.subr.mxu0 0.0
    %2009 = vmatpush2.msra.mxu0 0.0
    %2010 = vmatprep.subr.mxu0 0.0
    %2011 = vmatpush2.msra.mxu0 0.0
    %2012 = vmatprep.subr.mxu0 0.0
    %2013 = vmatpush2.msra.mxu0 0.0
    %2014 = vmatprep.subr.mxu0 0.0
    %2015 = vmatpush2.msra.mxu0 0.0
    %2016 = vmatprep.subr.mxu0 0.0
    %2017 = vmatpush2.msra.mxu0 0.0
    %2018 = vmatprep.subr.mxu0 0.0
    %2019 = vmatpush2.msra.mxu0 0.0
    %2020 = vmatprep.subr.mxu0 0.0
    %2021 = vmatpush2.msra.mxu0 0.0
    %2022 = vmatprep.subr.mxu0 0.0
    %2023 = vmatpush2.msra.mxu0 0.0
    %2024 = vmatprep.subr.mxu0 0.0
    %2025 = vmatpush2.msra.mxu0 0.0
    %2026 = vmatprep.subr.mxu0 0.0
    %2027 = vmatpush2.msra.mxu0 0.0
    %2028 = vmatprep.subr.mxu0 0.0
    %2029 = vmatpush2.msra.mxu0 0.0
    %2030 = vmatprep.subr.mxu0 0.0
    %2031 = vmatpush2.msra.mxu0 0.0
    %2032 = vmatprep.subr.mxu0 0.0
    %2033 = vmatpush2.msra.mxu0 0.0
    %2034 = vmatprep.subr.mxu0 0.0
    %2035 = vmatpush2.msra.mxu0 0.0
    %2036 = vmatprep.mubr.f32.mxu0 0.0
    %2037 = vmatmul.mubr.f32.gmra.mxu0 %v1899
    %v2038 = vpop.f32.mrf.mxu0
    %v2039 = vadd.f32 0.0, %v2038
    %v2040 = vpop.f32.mrf.mxu0
    %v2041 = vadd.f32 0.0, %v2040
    %2042 = vdwg.mxu0
    %v2047 = vrot.slane %v1968, 1
    %v2048 = vrot.slane %v1970, 1
    %v2049 = vrot.slane %v2039, 1
    %v2050 = vrot.slane %v2041, 1
    %v2051 = vrot.slane %v1968, 2
    %v2052 = vrot.slane %v1970, 2
    %v2053 = vrot.slane %v2039, 2
    %v2054 = vrot.slane %v2041, 2
    %v2063 = vadd.f32 %v219, %v2047
    %v2064 = vadd.f32 %v221, %v2048
    %v2065 = vadd.f32 %v296, %v2049
    %v2066 = vadd.f32 %v298, %v2050
    %v2067 = vadd.f32 %v225, %v2051
    %v2068 = vadd.f32 %v227, %v2052
    %v2069 = vadd.f32 %v302, %v2053
    %v2070 = vadd.f32 %v304, %v2054
    %v2071 = vxor.u32 %v2063, 2147483648
    %v2072 = vxor.u32 %v2067, 2147483648
    %v2073 = vmul.f32 %v2071, 1.442695
    %v2074 = vpow.pop %v2073
    %v2075 = vmul.f32 %v2072, 1.442695
    %v2076 = vpow.pop %v2075
    %v2077 = vadd.f32 %v2074, 1.0
    %v2078 = vadd.f32 %v2076, 1.0
    %v2079 = vrcp.pop %v2077
    %v2080 = vmul.f32 1.0, %v2079
    %v2081 = vrcp.pop %v2078
    %v2082 = vmul.f32 1.0, %v2081
    %v2083 = vxor.u32 %v2064, 2147483648
    %v2084 = vxor.u32 %v2068, 2147483648
    %v2085 = vmul.f32 %v2083, 1.442695
    %v2086 = vpow.pop %v2085
    %v2087 = vmul.f32 %v2084, 1.442695
    %v2088 = vpow.pop %v2087
    %v2089 = vadd.f32 %v2086, 1.0
    %v2090 = vadd.f32 %v2088, 1.0
    %v2091 = vrcp.pop %v2089
    %v2092 = vmul.f32 1.0, %v2091
    %v2093 = vrcp.pop %v2090
    %v2094 = vmul.f32 1.0, %v2093
    %v2095 = vtanh.pop %v2065
    %v2096 = vtanh.pop %v2069
    %v2097 = vxor.u32 %v2066, 2147483648
    %v2098 = vxor.u32 %v2070, 2147483648
    %v2099 = vmul.f32 %v2097, 1.442695
    %v2100 = vpow.pop %v2099
    %v2101 = vmul.f32 %v2098, 1.442695
    %v2102 = vpow.pop %v2101
    %v2103 = vadd.f32 %v2100, 1.0
    %v2104 = vadd.f32 %v2102, 1.0
    %v2105 = vrcp.pop %v2103
    %v2106 = vmul.f32 1.0, %v2105
    %v2107 = vrcp.pop %v2104
    %v2108 = vmul.f32 1.0, %v2107
    %v2111 = vrot.slane %v1889, 7
    %v2112 = vrot.slane %v1890, 7
    %v2115 = vmul.f32 %v2092, %v2111
    %v2116 = vmul.f32 %v2094, %v2112
    %v2117 = vmul.f32 %v2080, %v2095
    %v2118 = vmul.f32 %v2082, %v2096
    %v2119 = vadd.f32 %v2115, %v2117
    %v2120 = vadd.f32 %v2116, %v2118
    %v2121 = vtanh.pop %v2119
    %v2122 = vtanh.pop %v2120
    %v2123 = vmul.f32 %v2106, %v2121
    %v2124 = vmul.f32 %v2108, %v2122
    %v2127 = vrot.slane %v2124, 7
    %2130 = vst [vmem:[#allocation6 - $0x7] sm:$0x80] %v2123
    %2131 = vst [vmem:[#allocation6 + $0x1] sm:$0x1] %v2127
    %v2134 = vrot.slane %v2120, 7
    %2137 = vst [vmem:[#allocation8 - $0x7] sm:$0x80] %v2119
    %2138 = vst [vmem:[#allocation8 + $0x1] sm:$0x1] %v2134
    %v2139 = vld [vmem:[%s4] sm:$0xf]
    %v2140 = vld [vmem:[%s5] sm:$0x1]
    %v2142 = vlaneseq
    %v2143 = vshrl.u32 %v2142, 7
    %v2144 = vsub.s32 0, %v2143
    %v2145 = vrot.slane %v2140, %v2144
    %v2147 = vrot.slane %v42, 7
    %v2148 = vrot.slane %v43, 6
    %v2149 = vsel %vm523, %v2148, %v2147
    %v2150 = vsel %vm136, %v2149, 0
    %v2153 = vsel %vm143, %v2139, 0
    %2155 = vmatprep.subr.mxu0 0.0
    %2156 = vmatpush1.msra.mxu0 0.0
    %2157 = vmatprep.subr.mxu0 0.0
    %2158 = vmatpush1.msra.mxu0 0.0
    %2159 = vmatprep.subr.mxu0 0.0
    %2160 = vmatpush1.msra.mxu0 0.0
    %2161 = vmatprep.subr.mxu0 0.0
    %2162 = vmatpush1.msra.mxu0 0.0
    %2163 = vmatprep.subr.mxu0 0.0
    %2164 = vmatpush1.msra.mxu0 0.0
    %2165 = vmatprep.subr.mxu0 0.0
    %2166 = vmatpush1.msra.mxu0 0.0
    %2167 = vmatprep.subr.mxu0 0.0
    %2168 = vmatpush1.msra.mxu0 0.0
    %2169 = vmatprep.subr.mxu0 0.0
    %2170 = vmatpush1.msra.mxu0 0.0
    %2171 = vmatprep.subr.mxu0 0.0
    %2172 = vmatpush1.msra.mxu0 0.0
    %2173 = vmatprep.subr.mxu0 0.0
    %2174 = vmatpush1.msra.mxu0 0.0
    %2175 = vmatprep.subr.mxu0 0.0
    %2176 = vmatpush1.msra.mxu0 0.0
    %2177 = vmatprep.subr.mxu0 0.0
    %2178 = vmatpush1.msra.mxu0 0.0
    %2179 = vmatprep.subr.mxu0 0.0
    %2180 = vmatpush1.msra.mxu0 0.0
    %2181 = vmatprep.subr.mxu0 0.0
    %2182 = vmatpush1.msra.mxu0 0.0
    %2183 = vmatprep.subr.mxu0 0.0
    %2184 = vmatpush1.msra.mxu0 0.0
    %2185 = vmatprep.subr.mxu0 0.0
    %2186 = vmatpush1.msra.mxu0 %v2153
    %2187 = vmatprep.subr.mxu0 0.0
    %2188 = vmatpush2.msra.mxu0 0.0
    %2189 = vmatprep.subr.mxu0 0.0
    %2190 = vmatpush2.msra.mxu0 0.0
    %2191 = vmatprep.subr.mxu0 0.0
    %2192 = vmatpush2.msra.mxu0 0.0
    %2193 = vmatprep.subr.mxu0 0.0
    %2194 = vmatpush2.msra.mxu0 0.0
    %2195 = vmatprep.subr.mxu0 0.0
    %2196 = vmatpush2.msra.mxu0 0.0
    %2197 = vmatprep.subr.mxu0 0.0
    %2198 = vmatpush2.msra.mxu0 0.0
    %2199 = vmatprep.subr.mxu0 0.0
    %2200 = vmatpush2.msra.mxu0 0.0
    %2201 = vmatprep.subr.mxu0 0.0
    %2202 = vmatpush2.msra.mxu0 0.0
    %2203 = vmatprep.subr.mxu0 0.0
    %2204 = vmatpush2.msra.mxu0 0.0
    %2205 = vmatprep.subr.mxu0 0.0
    %2206 = vmatpush2.msra.mxu0 0.0
    %2207 = vmatprep.subr.mxu0 0.0
    %2208 = vmatpush2.msra.mxu0 0.0
    %2209 = vmatprep.subr.mxu0 0.0
    %2210 = vmatpush2.msra.mxu0 0.0
    %2211 = vmatprep.subr.mxu0 0.0
    %2212 = vmatpush2.msra.mxu0 0.0
    %2213 = vmatprep.subr.mxu0 0.0
    %2214 = vmatpush2.msra.mxu0 0.0
    %2215 = vmatprep.subr.mxu0 0.0
    %2216 = vmatpush2.msra.mxu0 0.0
    %2217 = vmatprep.subr.mxu0 0.0
    %2218 = vmatpush2.msra.mxu0 0.0
    %2219 = vmatprep.mubr.f32.mxu0 0.0
    %2220 = vmatmul.mubr.f32.gmra.mxu0 %v2150
    %v2221 = vpop.f32.mrf.mxu0
    %v2222 = vadd.f32 %v2145, %v2221
    %v2223 = vpop.f32.mrf.mxu0
    %2224 = vdwg.mxu0
    %2225 = vst [vmem:[#allocation5] sm:$0x3] %v2222
    // Predicated region
    $region30: #{tpu_custom_call.1} parent=1 // pred_check
      _
    $region31: #{tpu_custom_call.1} parent=1 // pred_check_branch
      %2227 = sbr.rel (0) target = $region33
    $region32: #{tpu_custom_call.1} parent=1 // pred_region
      %s2229 = ssub.s32 32, 32
      %2230 = vsyncadd [#allocation4], %s2229
      %s2232 = sshll.u32 [#allocation5], 4
      %s2233 = int_to_ptr.vmem [resolvable:$true] %s2232
      %2235 = dma.vmem_to_hbm [thread:$0]  %s2233, 32, %s6, [#allocation4]
    $region33: #{tpu_custom_call.1} parent=1 // pred_fallthru
      _
    // Predicated region
    $region34: #{tpu_custom_call.1} parent=1 // pred_check
      _
    $region35: #{tpu_custom_call.1} parent=1 // pred_check_branch
      %2237 = sbr.rel (0) target = $region37
    $region36: #{tpu_custom_call.1} parent=1 // pred_region
      %s2239 = ssub.s32 32, 32
      %2240 = vsyncadd [#allocation7], %s2239
      %s2242 = sshll.u32 [#allocation6], 4
      %s2243 = int_to_ptr.vmem [resolvable:$true] %s2242
      %2245 = dma.vmem_to_hbm [thread:$0]  %s2243, 32, %s7, [#allocation7]
    $region37: #{tpu_custom_call.1} parent=1 // pred_fallthru
      _
    // Predicated region
    $region38: #{tpu_custom_call.1} parent=1 // pred_check
      _
    $region39: #{tpu_custom_call.1} parent=1 // pred_check_branch
      %2247 = sbr.rel (0) target = $region41
    $region40: #{tpu_custom_call.1} parent=1 // pred_region
      %s2249 = ssub.s32 32, 32
      %2250 = vsyncadd [#allocation7], %s2249
      %s2252 = sshll.u32 [#allocation8], 4
      %s2253 = int_to_ptr.vmem [resolvable:$true] %s2252
      %2255 = dma.vmem_to_hbm [thread:$0]  %s2253, 32, %s8, [#allocation7]
    $region41: #{tpu_custom_call.1} parent=1 // pred_fallthru
      _
    // Predicated region
    $region42: #{tpu_custom_call.1} parent=1 // pred_check
      _
    $region43: #{tpu_custom_call.1} parent=1 // pred_check_branch
      %2257 = sbr.rel (0) target = $region45
    $region44: #{tpu_custom_call.1} parent=1 // pred_region
      %2258 = dma.done [#allocation4], 32
    $region45: #{tpu_custom_call.1} parent=1 // pred_fallthru
      _
    // Predicated region
    $region46: #{tpu_custom_call.1} parent=1 // pred_check
      _
    $region47: #{tpu_custom_call.1} parent=1 // pred_check_branch
      %2260 = sbr.rel (0) target = $region49
    $region48: #{tpu_custom_call.1} parent=1 // pred_region
      %2261 = dma.done [#allocation7], 32
    $region49: #{tpu_custom_call.1} parent=1 // pred_fallthru
      _
    // Predicated region
    $region50: #{tpu_custom_call.1} parent=1 // pred_check
      _
    $region51: #{tpu_custom_call.1} parent=1 // pred_check_branch
      %2263 = sbr.rel (0) target = $region53
    $region52: #{tpu_custom_call.1} parent=1 // pred_region
      %2264 = dma.done [#allocation7], 32
    $region53: #{tpu_custom_call.1} parent=1 // pred_fallthru
      _
    %2265 = vsyncpa [#allocation3], 1
    %2266 = vsyncpa [#allocation4], 1
    %2267 = vsyncpa [#allocation7], 1

</llo_original>
